<compile_context>
chip_gen: v6e
topology: v6e:2x2x1
jax: 0.10.0
libtpu: 0.0.40
codegen_flags: <defaults>
</compile_context>

<pallas_src>
import functools

import jax
import jax.numpy as jnp
from jax.experimental import pallas as pl
from jax.experimental.pallas import tpu as pltpu

LEAKY_A = 0.1


def _leaky_relu(x):
    # For 0 < a < 1, leaky_relu(x) == max(x, a*x): one mul + one max.
    return jnp.maximum(x, LEAKY_A * x)


# --------------------------------------------------------------------------
# Kernel
# --------------------------------------------------------------------------
def rnvp_kernel(z_ref, mask_ref, w1_ref, w23_ref, wh_ref, b_ref, x_ref, *,
                dim, hidden):
    """RNVP forward for one (D, batch_tile) tile; batch sits on the lane axis."""
    z = z_ref[...]                                # (D, Bt) f32
    mask = mask_ref[...].astype(jnp.float32)      # shipped bf16, cast on the VPU
    z2 = mask * z
    z1 = z - z2                                   # == (1 - mask) * z for {0,1} masks

    cd = w1_ref.dtype                             # matmul operand dtype (f32 or bf16)

    b = b_ref[...]                                # (3*H + 2*D, 1) f32, post-acc adds
    b1 = b[:hidden]
    b2 = b[hidden:2 * hidden]
    b3 = b[2 * hidden:3 * hidden]
    bh = b[3 * hidden:]

    # MLP(dim -> H -> H -> H); the 4th Linear is fused into the head below.
    h = _leaky_relu(jnp.dot(w1_ref[...], z2.astype(cd),
                            preferred_element_type=jnp.float32) + b1)
    h = _leaky_relu(jnp.dot(w23_ref[0], h.astype(cd),
                            preferred_element_type=jnp.float32) + b2)
    h = _leaky_relu(jnp.dot(w23_ref[1], h.astype(cd),
                            preferred_element_type=jnp.float32) + b3)

    # Fused head: rows [0:dim) = shift (t-head), rows [dim:2*dim) = scale (s-head).
    head = jnp.dot(wh_ref[...], h.astype(cd),
                   preferred_element_type=jnp.float32) + bh
    shift = head[:dim]
    scale = head[dim:]

    gate = jax.nn.sigmoid(scale)
    # x = z1*gate + (1-gate)*shift + z2, rewritten to save a multiply.
    x_ref[...] = gate * (z1 - shift) + shift + z2


# --------------------------------------------------------------------------
# Hardware-aware knobs
# --------------------------------------------------------------------------
def _device_kind():
    try:
        return jax.devices()[0].device_kind.lower()
    except Exception:  # pragma: no cover - no devices / odd backend
        return ""


def _is_v7():
    k = _device_kind()
    return ("v7" in k) or ("7x" in k)


def _default_compute_dtype():
    # v6e/v7x: full-rate bf16 MXU + bf16 VPU -> bf16 operands, f32 accumulation.
    # v5e / unknown: keep f32 operands (no bf16 VPU; casts are pure VALU cost).
    k = _device_kind()
    if ("v6" in k) or _is_v7():
        return jnp.bfloat16
    return jnp.float32


def _min_grid_steps():
    # v7x has 2 TensorCores/chip: keep >= 2 "parallel" grid steps so both get
    # a tile.  v5e/v6e iterate the grid serially on one TC: a single big step
    # avoids pure ~600-cycle per-step overhead for small batches.
    return 2 if _is_v7() else 1


def _pick_batch_tile(B, *, min_grid=1, cap=2048):
    """Largest multiple-of-128 divisor of B (preferring multiples of 256 for
    the 256-wide v6e/v7x MXU), capped, leaving at least `min_grid` grid steps.
    Falls back to one full-width tile for tiny / ragged batches."""
    best128 = best256 = None
    t = 128
    while t <= min(B, cap):
        if B % t == 0 and (B // t) >= min_grid:
            best128 = t
            if t % 256 == 0:
                best256 = t
        t += 128
    if best256 is not None:
        return best256
    if best128 is not None:
        return best128
    return B


# --------------------------------------------------------------------------
# Parameter packing (offline: fuse head, pad hidden width, consolidate)
# --------------------------------------------------------------------------
def pack_params(params, dim, compute_dtype=jnp.float32):
    """params: 6 (W, b) pairs in nn.Linear convention (W is (out, in)).

    * Head fusion: no activation after w4, so (wt|ws) @ w4 composes offline.
    * Hidden width padded up to a multiple of 128 with exact zeros.
    * w2/w3 stacked into one array, all biases concatenated into one array.
    """
    (w1, b1), (w2, b2), (w3, b3), (w4, b4), (wt, bt), (ws, bs) = params
    h0 = w1.shape[0]
    assert w2.shape == (h0, h0) and w3.shape == (h0, h0) and w4.shape == (h0, h0), \
        "kernel assumes 4 equal hidden sizes (h_sizes = [H, H, H, H])"
    hp = ((h0 + 127) // 128) * 128

    hi = jax.lax.Precision.HIGHEST
    w_ts = jnp.concatenate([wt, ws], axis=0)                 # (2D, H0)
    w_head = jnp.dot(w_ts, w4, precision=hi)                 # (2D, H0)
    b_head = jnp.dot(w_ts, b4, precision=hi) + jnp.concatenate([bt, bs])  # (2D,)

    def pad_w(w, rows, cols):
        return jnp.zeros((rows, cols), jnp.float32).at[:w.shape[0], :w.shape[1]].set(w)

    def pad_b(v, rows):
        return jnp.zeros((rows,), jnp.float32).at[:v.shape[0]].set(v)

    w1p = pad_w(w1, hp, dim)                                 # (H, D)
    w23p = jnp.stack([pad_w(w2, hp, hp), pad_w(w3, hp, hp)])  # (2, H, H)
    whp = pad_w(w_head, 2 * dim, hp)                         # (2D, H)
    b_all = jnp.concatenate(
        [pad_b(b1, hp), pad_b(b2, hp), pad_b(b3, hp), b_head])  # (3H + 2D,)

    cd = compute_dtype
    return dict(
        w1=w1p.astype(cd),
        w23=w23p.astype(cd),
        wh=whp.astype(cd),
        b=b_all.astype(jnp.float32)[:, None],  # (3H+2D, 1): broadcasts over lanes
        hidden=hp,
        dim=dim,
    )


# --------------------------------------------------------------------------
# Forward wrappers
# --------------------------------------------------------------------------
def rnvp_forward_t(zt, maskt, packed, *, batch_tile=None):
    """Transposed, lane-dense API: zt, maskt are (D, B); returns x^T as (D, B).

    Keeping activations in this layout across flow layers removes all
    host-side transposes (each a full extra HBM pass) from the hot path.
    """
    D, B = zt.shape
    assert packed["dim"] == D
    H = packed["hidden"]

    if batch_tile is None:
        batch_tile = _pick_batch_tile(B, min_grid=_min_grid_steps())
    if B % batch_tile != 0:
        raise ValueError(f"batch {B} is not a multiple of batch_tile {batch_tile}")
    grid = (B // batch_tile,)

    data_spec = pl.BlockSpec((D, batch_tile), lambda i: (0, i))

    def full_spec(arr):
        nd = arr.ndim  # grid-invariant: constant block index -> no per-step DMA
        return pl.BlockSpec(arr.shape, lambda i, nd=nd: (0,) * nd)

    w1, w23, wh, b = packed["w1"], packed["w23"], packed["wh"], packed["b"]

    return pl.pallas_call(
        functools.partial(rnvp_kernel, dim=D, hidden=H),
        out_shape=jax.ShapeDtypeStruct((D, B), jnp.float32),
        grid_spec=pltpu.PrefetchScalarGridSpec(
            num_scalar_prefetch=0,
            grid=grid,
            in_specs=[data_spec, data_spec,
                      full_spec(w1), full_spec(w23), full_spec(wh), full_spec(b)],
            out_specs=data_spec,
        ),
        # VMEM use is ~hundreds of KB even at batch_tile=2048; no need to
        # raise vmem_limit_bytes at these sizes on any generation.
        compiler_params=pltpu.CompilerParams(
            dimension_semantics=("parallel",)),
    )(zt, maskt, w1, w23, wh, b)


def rnvp_forward(z, mask, params, *, batch_tile=None, compute_dtype=None):
    """Batch-major (B, D) convenience wrapper matching the PyTorch interface.
    Only for one-off use: the boundary transposes cost an extra HBM pass each;
    multi-layer flows should stay in the (D, B) layout via rnvp_forward_t."""
    if compute_dtype is None:
        compute_dtype = _default_compute_dtype()
    packed = pack_params(params, z.shape[1], compute_dtype)
    xt = rnvp_forward_t(jnp.transpose(z), jnp.transpose(mask), packed,
                        batch_tile=batch_tile)
    return jnp.transpose(xt)


# --------------------------------------------------------------------------
# Reference / init
# --------------------------------------------------------------------------
def init_params(key, dim, h_sizes):
    """Deterministic init mimicking nn.Linear defaults (uniform +/- 1/sqrt(fan_in)).
    Weights stored PyTorch-style as (out, in); biases as (out,)."""
    sizes = [dim] + list(h_sizes)
    params = []
    for s_in, s_out in zip(sizes, sizes[1:]):
        key, kw, kb = jax.random.split(key, 3)
        bound = 1.0 / float(s_in) ** 0.5
        w = jax.random.uniform(kw, (s_out, s_in), jnp.float32, -bound, bound)
        b = jax.random.uniform(kb, (s_out,), jnp.float32, -bound, bound)
        params.append((w, b))
    for _ in range(2):  # t and s heads: Linear(h_sizes[-1], dim)
        key, kw, kb = jax.random.split(key, 3)
        bound = 1.0 / float(h_sizes[-1]) ** 0.5
        w = jax.random.uniform(kw, (dim, h_sizes[-1]), jnp.float32, -bound, bound)
        b = jax.random.uniform(kb, (dim,), jnp.float32, -bound, bound)
        params.append((w, b))
    return params


def rnvp_reference(z, mask, params):
    """Pure-JAX reference mirroring the PyTorch module (unfused, batch-major)."""
    (w1, b1), (w2, b2), (w3, b3), (w4, b4), (wt, bt), (ws, bs) = params
    z1, z2 = (1.0 - mask) * z, mask * z
    h = _leaky_relu(z2 @ w1.T + b1)
    h = _leaky_relu(h @ w2.T + b2)
    h = _leaky_relu(h @ w3.T + b3)
    y = h @ w4.T + b4
    shift = y @ wt.T + bt
    scale = y @ ws.T + bs
    gate = jax.nn.sigmoid(scale)
    return z1 * gate + (1.0 - gate) * shift + z2


# --------------------------------------------------------------------------
# Demo
# --------------------------------------------------------------------------
if __name__ == "__main__":
    # dim=16 features, 512-sample batch: v5e/v6e -> one 512-wide tile,
    # v7x -> two 256-wide "parallel" tiles (one per TensorCore).
    B, D = 512, 16
    H_SIZES = [75, 75, 75, 75]

    key = jax.random.PRNGKey(0)
    k_z, k_mask, k_params = jax.random.split(key, 3)

    # Activations built directly in the lane-dense (D, B) layout (no transposes
    # in the hot path); mask shipped as bf16 {0,1} to cut HBM traffic.
    zt = jax.random.normal(k_z, (D, B), jnp.float32)
    maskt = jax.random.bernoulli(k_mask, 0.5, (D, B)).astype(jnp.bfloat16)

    params = init_params(k_params, D, H_SIZES)

    # ---- correctness gate: f32 operands, tight tolerance vs the PyTorch-style
    # reference (differences come only from head fusion / matmul reassociation).
    packed_f32 = pack_params(params, D, compute_dtype=jnp.float32)
    xt = jax.block_until_ready(rnvp_forward_t(zt, maskt, packed_f32))

    x_ref = rnvp_reference(jnp.transpose(zt),
                           jnp.transpose(maskt.astype(jnp.float32)), params)
    assert jnp.allclose(jnp.transpose(xt), x_ref, atol=2e-3, rtol=2e-3), \
        "mismatch vs reference (f32 path)"

    # ---- performance path: generation-appropriate operand dtype (bf16 on
    # v6e/v7x, f32 on v5e); loose sanity check (bf16 operand rounding only).
    packed_fast = pack_params(params, D, compute_dtype=_default_compute_dtype())
    xt_fast = jax.block_until_ready(rnvp_forward_t(zt, maskt, packed_fast))
    assert jnp.allclose(jnp.transpose(xt_fast), x_ref, atol=1e-1, rtol=1e-1), \
        "mismatch vs reference (fast path)"

    print("KERNEL_OK")
</pallas_src>

<mosaic_0001>
module attributes {stable_mosaic.version = 11 : i64} {
  func.func @rnvp_kernel(%arg0: i32, %arg1: memref<16x512xf32, #tpu.memory_space<vmem>>, %arg2: memref<16x512xbf16, #tpu.memory_space<vmem>>, %arg3: memref<128x16xf32, #tpu.memory_space<vmem>>, %arg4: memref<2x128x128xf32, #tpu.memory_space<vmem>>, %arg5: memref<32x128xf32, #tpu.memory_space<vmem>>, %arg6: memref<416x1xf32, #tpu.memory_space<vmem>>, %arg7: memref<16x512xf32, #tpu.memory_space<vmem>>) attributes {dimension_semantics = [#tpu.dimension_semantics<parallel>], iteration_bounds = array<i64: 1>, scalar_prefetch = 0 : i64, scratch_operands = 0 : i64, tpu.core_type = #tpu.core_type<tc>, window_params = [{transform_indices = @transform_0, window_bounds = array<i64: 16, 512>}, {transform_indices = @transform_1, window_bounds = array<i64: 16, 512>}, {pipeline_mode = #tpu.pipeline_mode<synchronous>, transform_indices = @transform_2, window_bounds = array<i64: 128, 16>}, {pipeline_mode = #tpu.pipeline_mode<synchronous>, transform_indices = @transform_3, window_bounds = array<i64: 2, 128, 128>}, {pipeline_mode = #tpu.pipeline_mode<synchronous>, transform_indices = @transform_4, window_bounds = array<i64: 32, 128>}, {pipeline_mode = #tpu.pipeline_mode<synchronous>, transform_indices = @transform_5, window_bounds = array<i64: 416, 1>}, {transform_indices = @transform_6, window_bounds = array<i64: 16, 512>}]} {
    %c0 = arith.constant 0 : index
    %c0_0 = arith.constant 0 : index
    %0 = vector.load %arg1[%c0, %c0_0] : memref<16x512xf32, #tpu.memory_space<vmem>>, vector<16x512xf32>
    %c0_1 = arith.constant 0 : index
    %c0_2 = arith.constant 0 : index
    %1 = vector.load %arg2[%c0_1, %c0_2] : memref<16x512xbf16, #tpu.memory_space<vmem>>, vector<16x512xbf16>
    %2 = arith.extf %1 : vector<16x512xbf16> to vector<16x512xf32>
    %3 = arith.mulf %2, %0 : vector<16x512xf32>
    %4 = arith.subf %0, %3 : vector<16x512xf32>
    %c0_3 = arith.constant 0 : index
    %c0_4 = arith.constant 0 : index
    %5 = vector.load %arg6[%c0_3, %c0_4] : memref<416x1xf32, #tpu.memory_space<vmem>>, vector<416x1xf32>
    %6 = vector.extract_strided_slice %5 {offsets = [0, 0], sizes = [128, 1], strides = [1, 1]} : vector<416x1xf32> to vector<128x1xf32>
    %7 = vector.extract_strided_slice %5 {offsets = [128, 0], sizes = [128, 1], strides = [1, 1]} : vector<416x1xf32> to vector<128x1xf32>
    %8 = vector.extract_strided_slice %5 {offsets = [256, 0], sizes = [128, 1], strides = [1, 1]} : vector<416x1xf32> to vector<128x1xf32>
    %9 = vector.extract_strided_slice %5 {offsets = [384, 0], sizes = [32, 1], strides = [1, 1]} : vector<416x1xf32> to vector<32x1xf32>
    %c0_5 = arith.constant 0 : index
    %c0_6 = arith.constant 0 : index
    %10 = vector.load %arg3[%c0_5, %c0_6] : memref<128x16xf32, #tpu.memory_space<vmem>>, vector<128x16xf32>
    %cst = arith.constant dense<0.000000e+00> : vector<128x512xf32>
    %11 = tpu.matmul %10, %3, %cst {dimension_numbers = #tpu.dot_dimension_numbers<[1], [0], [0], [1], [0, 0, 1, 1], [], []>} : vector<128x16xf32>, vector<16x512xf32>, vector<128x512xf32> -> vector<128x512xf32>
    %12 = vector.broadcast %6 : vector<128x1xf32> to vector<128x512xf32>
    %13 = arith.addf %11, %12 : vector<128x512xf32>
    %cst_7 = arith.constant 1.000000e-01 : f32
    %14 = vector.broadcast %cst_7 : f32 to vector<128x512xf32>
    %15 = arith.mulf %14, %13 : vector<128x512xf32>
    %16 = arith.maximumf %13, %15 : vector<128x512xf32>
    %c0_8 = arith.constant 0 : index
    %c0_9 = arith.constant 0 : index
    %c0_10 = arith.constant 0 : index
    %17 = vector.load %arg4[%c0_8, %c0_9, %c0_10] : memref<2x128x128xf32, #tpu.memory_space<vmem>>, vector<1x128x128xf32>
    %18 = vector.shape_cast %17 : vector<1x128x128xf32> to vector<128x128xf32>
    %cst_11 = arith.constant dense<0.000000e+00> : vector<128x512xf32>
    %19 = tpu.matmul %18, %16, %cst_11 {dimension_numbers = #tpu.dot_dimension_numbers<[1], [0], [0], [1], [0, 0, 1, 1], [], []>} : vector<128x128xf32>, vector<128x512xf32>, vector<128x512xf32> -> vector<128x512xf32>
    %20 = vector.broadcast %7 : vector<128x1xf32> to vector<128x512xf32>
    %21 = arith.addf %19, %20 : vector<128x512xf32>
    %cst_12 = arith.constant 1.000000e-01 : f32
    %22 = vector.broadcast %cst_12 : f32 to vector<128x512xf32>
    %23 = arith.mulf %22, %21 : vector<128x512xf32>
    %24 = arith.maximumf %21, %23 : vector<128x512xf32>
    %c1 = arith.constant 1 : index
    %c0_13 = arith.constant 0 : index
    %c0_14 = arith.constant 0 : index
    %25 = vector.load %arg4[%c1, %c0_13, %c0_14] : memref<2x128x128xf32, #tpu.memory_space<vmem>>, vector<1x128x128xf32>
    %26 = vector.shape_cast %25 : vector<1x128x128xf32> to vector<128x128xf32>
    %cst_15 = arith.constant dense<0.000000e+00> : vector<128x512xf32>
    %27 = tpu.matmul %26, %24, %cst_15 {dimension_numbers = #tpu.dot_dimension_numbers<[1], [0], [0], [1], [0, 0, 1, 1], [], []>} : vector<128x128xf32>, vector<128x512xf32>, vector<128x512xf32> -> vector<128x512xf32>
    %28 = vector.broadcast %8 : vector<128x1xf32> to vector<128x512xf32>
    %29 = arith.addf %27, %28 : vector<128x512xf32>
    %cst_16 = arith.constant 1.000000e-01 : f32
    %30 = vector.broadcast %cst_16 : f32 to vector<128x512xf32>
    %31 = arith.mulf %30, %29 : vector<128x512xf32>
    %32 = arith.maximumf %29, %31 : vector<128x512xf32>
    %c0_17 = arith.constant 0 : index
    %c0_18 = arith.constant 0 : index
    %33 = vector.load %arg5[%c0_17, %c0_18] : memref<32x128xf32, #tpu.memory_space<vmem>>, vector<32x128xf32>
    %cst_19 = arith.constant dense<0.000000e+00> : vector<32x512xf32>
    %34 = tpu.matmul %33, %32, %cst_19 {dimension_numbers = #tpu.dot_dimension_numbers<[1], [0], [0], [1], [0, 0, 1, 1], [], []>} : vector<32x128xf32>, vector<128x512xf32>, vector<32x512xf32> -> vector<32x512xf32>
    %35 = vector.broadcast %9 : vector<32x1xf32> to vector<32x512xf32>
    %36 = arith.addf %34, %35 : vector<32x512xf32>
    %37 = vector.extract_strided_slice %36 {offsets = [0, 0], sizes = [16, 512], strides = [1, 1]} : vector<32x512xf32> to vector<16x512xf32>
    %38 = vector.extract_strided_slice %36 {offsets = [16, 0], sizes = [16, 512], strides = [1, 1]} : vector<32x512xf32> to vector<16x512xf32>
    %39 = arith.negf %38 : vector<16x512xf32>
    %40 = math.exp %39 : vector<16x512xf32>
    %cst_20 = arith.constant 1.000000e+00 : f32
    %41 = vector.broadcast %cst_20 : f32 to vector<16x512xf32>
    %42 = arith.addf %41, %40 : vector<16x512xf32>
    %43 = arith.divf %41, %42 : vector<16x512xf32>
    %44 = arith.subf %4, %37 : vector<16x512xf32>
    %45 = arith.mulf %43, %44 : vector<16x512xf32>
    %46 = arith.addf %45, %37 : vector<16x512xf32>
    %47 = arith.addf %46, %3 : vector<16x512xf32>
    %c0_21 = arith.constant 0 : index
    %c0_22 = arith.constant 0 : index
    %48 = vector.load %arg7[%c0_21, %c0_22] : memref<16x512xf32, #tpu.memory_space<vmem>>, vector<16x512xf32>
    tpu.vector_store %arg7[%c0_21, %c0_22], %47 {strides = array<i32>} : memref<16x512xf32, #tpu.memory_space<vmem>>, vector<16x512xf32>,
    return
  }
  func.func @transform_0(%arg0: i32) -> (i32, i32) {
    %c0_i32 = arith.constant 0 : i32
    %c0_i32_0 = arith.constant 0 : i32
    return %c0_i32, %arg0 : i32, i32
  }
  func.func @transform_1(%arg0: i32) -> (i32, i32) {
    %c0_i32 = arith.constant 0 : i32
    %c0_i32_0 = arith.constant 0 : i32
    return %c0_i32, %arg0 : i32, i32
  }
  func.func @transform_2(%arg0: i32) -> (i32, i32) {
    %c0_i32 = arith.constant 0 : i32
    %c0_i32_0 = arith.constant 0 : i32
    %c0_i32_1 = arith.constant 0 : i32
    return %c0_i32, %c0_i32_0 : i32, i32
  }
  func.func @transform_3(%arg0: i32) -> (i32, i32, i32) {
    %c0_i32 = arith.constant 0 : i32
    %c0_i32_0 = arith.constant 0 : i32
    %c0_i32_1 = arith.constant 0 : i32
    %c0_i32_2 = arith.constant 0 : i32
    return %c0_i32, %c0_i32_0, %c0_i32_1 : i32, i32, i32
  }
  func.func @transform_4(%arg0: i32) -> (i32, i32) {
    %c0_i32 = arith.constant 0 : i32
    %c0_i32_0 = arith.constant 0 : i32
    %c0_i32_1 = arith.constant 0 : i32
    return %c0_i32, %c0_i32_0 : i32, i32
  }
  func.func @transform_5(%arg0: i32) -> (i32, i32) {
    %c0_i32 = arith.constant 0 : i32
    %c0_i32_0 = arith.constant 0 : i32
    %c0_i32_1 = arith.constant 0 : i32
    return %c0_i32, %c0_i32_0 : i32, i32
  }
  func.func @transform_6(%arg0: i32) -> (i32, i32) {
    %c0_i32 = arith.constant 0 : i32
    %c0_i32_0 = arith.constant 0 : i32
    return %c0_i32, %arg0 : i32, i32
  }
}

</mosaic_0001>

<llo_original>
// kernel: tpu_custom_call.1
$region0: #{tpu_custom_call.1}
  #allocation0 [shape = 'u32[]', space=smem, size = 0x4, offset = 0x4, fixed_abs, tag = 'smem constant byte address 0x4 - core index']
  #allocation1 [shape = 'u32[144,128]{1,0:T(1,128)}', space=vmem, size = 0x12000, scoped, tag = 'internal scratch']
  %s0 = inlined_call_operand.vmem [shape: f32[16,512], index: 0, kind: input, shape index: {}]
  %s1 = inlined_call_operand.vmem [shape: bf16[16,512], index: 1, kind: input, shape index: {}]
  %s2 = inlined_call_operand.vmem [shape: f32[128,16], index: 2, kind: input, shape index: {}]
  %s3 = inlined_call_operand.vmem [shape: f32[2,128,128], index: 3, kind: input, shape index: {}]
  %s4 = inlined_call_operand.vmem [shape: f32[32,128], index: 4, kind: input, shape index: {}]
  %s5 = inlined_call_operand.vmem [shape: f32[416,1], index: 5, kind: input, shape index: {}]
  %s6 = inlined_call_operand.hbm [shape: f32[16,512], index: 6, kind: output, shape index: {}]
  %s7 = sld [smem:[#allocation0]]
  $region34: #{tpu_custom_call.1} parent=0
    _
  %s9 = ssub.s32 1, %s7
  %s10 = scalar_select 0, %s9, %s7
  $region1: #{tpu_custom_call.1} parent=0
    #allocation2 [shape = 'u8[32768]{0}', space=vmem, size = 0x8000, scoped, tag = 'output window, operand 0, single buffered']
    #allocation3 [shape = 's32[1]{0}', space=sflag, size = 0x4, scoped, tag = 'scoped memory for tpu_custom_call.1']
    %11 = vsyncpa [#allocation3], 0
    // Predicated region
    $region2: #{tpu_custom_call.1} parent=1 // pred_check
      _
    $region3: #{tpu_custom_call.1} parent=1 // pred_check_branch
      %13 = sbr.rel (0) target = $region5
    $region4: #{tpu_custom_call.1} parent=1 // pred_region
      _
    $region5: #{tpu_custom_call.1} parent=1 // pred_fallthru
      _
    // Predicated region
    $region6: #{tpu_custom_call.1} parent=1 // pred_check
      _
    $region7: #{tpu_custom_call.1} parent=1 // pred_check_branch
      %15 = sbr.rel (0) target = $region9
    $region8: #{tpu_custom_call.1} parent=1 // pred_region
      _
    $region9: #{tpu_custom_call.1} parent=1 // pred_fallthru
      _
    // Predicated region
    $region10: #{tpu_custom_call.1} parent=1 // pred_check
      _
    $region11: #{tpu_custom_call.1} parent=1 // pred_check_branch
      %17 = sbr.rel (0) target = $region13
    $region12: #{tpu_custom_call.1} parent=1 // pred_region
      _
    $region13: #{tpu_custom_call.1} parent=1 // pred_fallthru
      _
    // Predicated region
    $region14: #{tpu_custom_call.1} parent=1 // pred_check
      _
    $region15: #{tpu_custom_call.1} parent=1 // pred_check_branch
      %19 = sbr.rel (0) target = $region17
    $region16: #{tpu_custom_call.1} parent=1 // pred_region
      _
    $region17: #{tpu_custom_call.1} parent=1 // pred_fallthru
      _
    // Predicated region
    $region18: #{tpu_custom_call.1} parent=1 // pred_check
      _
    $region19: #{tpu_custom_call.1} parent=1 // pred_check_branch
      %21 = sbr.rel (0) target = $region21
    $region20: #{tpu_custom_call.1} parent=1 // pred_region
      _
    $region21: #{tpu_custom_call.1} parent=1 // pred_fallthru
      _
    // Predicated region
    $region22: #{tpu_custom_call.1} parent=1 // pred_check
      _
    $region23: #{tpu_custom_call.1} parent=1 // pred_check_branch
      %23 = sbr.rel (0) target = $region25
    $region24: #{tpu_custom_call.1} parent=1 // pred_region
      _
    $region25: #{tpu_custom_call.1} parent=1 // pred_fallthru
      _
    %v24 = vld [vmem:[%s0] sm:$0xff]
    %v25 = vld [vmem:[%s0 + $0x8] sm:$0xff]
    %v26 = vld [vmem:[%s0 + $0x10] sm:$0xff]
    %v27 = vld [vmem:[%s0 + $0x18] sm:$0xff]
    %v28 = vld [vmem:[%s0 + $0x20] sm:$0xff]
    %v29 = vld [vmem:[%s0 + $0x28] sm:$0xff]
    %v30 = vld [vmem:[%s0 + $0x30] sm:$0xff]
    %v31 = vld [vmem:[%s0 + $0x38] sm:$0xff]
    %v32 = vld [vmem:[%s1] sm:$0xff]
    %v33 = vld [vmem:[%s1 + $0x8] sm:$0xff]
    %v34 = vld [vmem:[%s1 + $0x10] sm:$0xff]
    %v35 = vld [vmem:[%s1 + $0x18] sm:$0xff]
    %v36 = vunpack.c.l.bf16 %v32
    %v37 = vunpack.c.h.bf16 %v32
    %v38 = vunpack.c.l.bf16 %v33
    %v39 = vunpack.c.h.bf16 %v33
    %v40 = vunpack.c.l.bf16 %v34
    %v41 = vunpack.c.h.bf16 %v34
    %v42 = vunpack.c.l.bf16 %v35
    %v43 = vunpack.c.h.bf16 %v35
    %v44 = vmul.f32 %v36, %v24
    %v45 = vmul.f32 %v37, %v25
    %v46 = vmul.f32 %v38, %v26
    %v47 = vmul.f32 %v39, %v27
    %v48 = vmul.f32 %v40, %v28
    %v49 = vmul.f32 %v41, %v29
    %v50 = vmul.f32 %v42, %v30
    %v51 = vmul.f32 %v43, %v31
    %v52 = vsub.f32 %v24, %v44
    %v53 = vsub.f32 %v25, %v45
    %v54 = vsub.f32 %v26, %v46
    %v55 = vsub.f32 %v27, %v47
    %v56 = vsub.f32 %v28, %v48
    %v57 = vsub.f32 %v29, %v49
    %v58 = vsub.f32 %v30, %v50
    %v59 = vsub.f32 %v31, %v51
    %v60 = vld [vmem:[%s5] sm:$0xff]
    %v61 = vld [vmem:[%s5 + $0x8] sm:$0xff]
    %v62 = vld [vmem:[%s5 + $0x10] sm:$0xff]
    %v63 = vld [vmem:[%s5 + $0x18] sm:$0xff]
    %v64 = vld [vmem:[%s5 + $0x20] sm:$0xff]
    %v65 = vld [vmem:[%s5 + $0x28] sm:$0xff]
    %v66 = vld [vmem:[%s5 + $0x30] sm:$0xff]
    %v67 = vld [vmem:[%s5 + $0x38] sm:$0xff]
    %v68 = vld [vmem:[%s5 + $0x40] sm:$0xff]
    %v69 = vld [vmem:[%s5 + $0x48] sm:$0xff]
    %v70 = vld [vmem:[%s5 + $0x50] sm:$0xff]
    %v71 = vld [vmem:[%s5 + $0x58] sm:$0xff]
    %v72 = vld [vmem:[%s5 + $0x60] sm:$0xff]
    %v73 = vld [vmem:[%s5 + $0x68] sm:$0xff]
    %v74 = vld [vmem:[%s5 + $0x70] sm:$0xff]
    %v75 = vld [vmem:[%s5 + $0x78] sm:$0xff]
    %v76 = vld [vmem:[%s5 + $0x80] sm:$0xff]
    %v77 = vld [vmem:[%s5 + $0x88] sm:$0xff]
    %v78 = vld [vmem:[%s5 + $0x90] sm:$0xff]
    %v79 = vld [vmem:[%s5 + $0x98] sm:$0xff]
    %v80 = vld [vmem:[%s5 + $0xa0] sm:$0xff]
    %v81 = vld [vmem:[%s5 + $0xa8] sm:$0xff]
    %v82 = vld [vmem:[%s5 + $0xb0] sm:$0xff]
    %v83 = vld [vmem:[%s5 + $0xb8] sm:$0xff]
    %v84 = vld [vmem:[%s5 + $0xc0] sm:$0xff]
    %v85 = vld [vmem:[%s5 + $0xc8] sm:$0xff]
    %v86 = vld [vmem:[%s5 + $0xd0] sm:$0xff]
    %v87 = vld [vmem:[%s5 + $0xd8] sm:$0xff]
    %v88 = vld [vmem:[%s5 + $0xe0] sm:$0xff]
    %v89 = vld [vmem:[%s5 + $0xe8] sm:$0xff]
    %v90 = vld [vmem:[%s5 + $0xf0] sm:$0xff]
    %v91 = vld [vmem:[%s5 + $0xf8] sm:$0xff]
    %v92 = vld [vmem:[%s5 + $0x100] sm:$0xff]
    %v93 = vld [vmem:[%s5 + $0x108] sm:$0xff]
    %v94 = vld [vmem:[%s5 + $0x110] sm:$0xff]
    %v95 = vld [vmem:[%s5 + $0x118] sm:$0xff]
    %v96 = vld [vmem:[%s5 + $0x120] sm:$0xff]
    %v97 = vld [vmem:[%s5 + $0x128] sm:$0xff]
    %v98 = vld [vmem:[%s5 + $0x130] sm:$0xff]
    %v99 = vld [vmem:[%s5 + $0x138] sm:$0xff]
    %v100 = vld [vmem:[%s5 + $0x140] sm:$0xff]
    %v101 = vld [vmem:[%s5 + $0x148] sm:$0xff]
    %v102 = vld [vmem:[%s5 + $0x150] sm:$0xff]
    %v103 = vld [vmem:[%s5 + $0x158] sm:$0xff]
    %v104 = vld [vmem:[%s5 + $0x160] sm:$0xff]
    %v105 = vld [vmem:[%s5 + $0x168] sm:$0xff]
    %v106 = vld [vmem:[%s5 + $0x170] sm:$0xff]
    %v107 = vld [vmem:[%s5 + $0x178] sm:$0xff]
    %v108 = vld [vmem:[%s5 + $0x180] sm:$0xff]
    %v109 = vld [vmem:[%s5 + $0x188] sm:$0xff]
    %v110 = vld [vmem:[%s5 + $0x190] sm:$0xff]
    %v111 = vld [vmem:[%s5 + $0x198] sm:$0xff]
    %v112 = vld [vmem:[%s2] sm:$0xff]
    %v113 = vld [vmem:[%s2 + $0x8] sm:$0xff]
    %v114 = vld [vmem:[%s2 + $0x10] sm:$0xff]
    %v115 = vld [vmem:[%s2 + $0x18] sm:$0xff]
    %v116 = vld [vmem:[%s2 + $0x20] sm:$0xff]
    %v117 = vld [vmem:[%s2 + $0x28] sm:$0xff]
    %v118 = vld [vmem:[%s2 + $0x30] sm:$0xff]
    %v119 = vld [vmem:[%s2 + $0x38] sm:$0xff]
    %v120 = vld [vmem:[%s2 + $0x40] sm:$0xff]
    %v121 = vld [vmem:[%s2 + $0x48] sm:$0xff]
    %v122 = vld [vmem:[%s2 + $0x50] sm:$0xff]
    %v123 = vld [vmem:[%s2 + $0x58] sm:$0xff]
    %v124 = vld [vmem:[%s2 + $0x60] sm:$0xff]
    %v125 = vld [vmem:[%s2 + $0x68] sm:$0xff]
    %v126 = vld [vmem:[%s2 + $0x70] sm:$0xff]
    %v127 = vld [vmem:[%s2 + $0x78] sm:$0xff]
    %129 = vset.pattern.permute.xlu0 0
    %130 = vperm.xlu0 %129, %v60
    %v131 = vpop.permute.xlu0 %130
    %134 = vset.pattern.permute.xlu0 0
    %135 = vperm.xlu0 %134, %v61
    %v136 = vpop.permute.xlu0 %135
    %139 = vset.pattern.permute.xlu0 0
    %140 = vperm.xlu0 %139, %v62
    %v141 = vpop.permute.xlu0 %140
    %144 = vset.pattern.permute.xlu0 0
    %145 = vperm.xlu0 %144, %v63
    %v146 = vpop.permute.xlu0 %145
    %149 = vset.pattern.permute.xlu0 0
    %150 = vperm.xlu0 %149, %v64
    %v151 = vpop.permute.xlu0 %150
    %154 = vset.pattern.permute.xlu0 0
    %155 = vperm.xlu0 %154, %v65
    %v156 = vpop.permute.xlu0 %155
    %159 = vset.pattern.permute.xlu0 0
    %160 = vperm.xlu0 %159, %v66
    %v161 = vpop.permute.xlu0 %160
    %164 = vset.pattern.permute.xlu0 0
    %165 = vperm.xlu0 %164, %v67
    %v166 = vpop.permute.xlu0 %165
    %169 = vset.pattern.permute.xlu0 0
    %170 = vperm.xlu0 %169, %v68
    %v171 = vpop.permute.xlu0 %170
    %174 = vset.pattern.permute.xlu0 0
    %175 = vperm.xlu0 %174, %v69
    %v176 = vpop.permute.xlu0 %175
    %179 = vset.pattern.permute.xlu0 0
    %180 = vperm.xlu0 %179, %v70
    %v181 = vpop.permute.xlu0 %180
    %184 = vset.pattern.permute.xlu0 0
    %185 = vperm.xlu0 %184, %v71
    %v186 = vpop.permute.xlu0 %185
    %189 = vset.pattern.permute.xlu0 0
    %190 = vperm.xlu0 %189, %v72
    %v191 = vpop.permute.xlu0 %190
    %194 = vset.pattern.permute.xlu0 0
    %195 = vperm.xlu0 %194, %v73
    %v196 = vpop.permute.xlu0 %195
    %199 = vset.pattern.permute.xlu0 0
    %200 = vperm.xlu0 %199, %v74
    %v201 = vpop.permute.xlu0 %200
    %204 = vset.pattern.permute.xlu0 0
    %205 = vperm.xlu0 %204, %v75
    %v206 = vpop.permute.xlu0 %205
    %vm208 = vcmask 130048
    %v210 = vsel %vm208, %v112, 0
    %v213 = vsel %vm208, %v113, 0
    %v216 = vsel %vm208, %v114, 0
    %v219 = vsel %vm208, %v115, 0
    %v222 = vsel %vm208, %v116, 0
    %v225 = vsel %vm208, %v117, 0
    %v228 = vsel %vm208, %v118, 0
    %v231 = vsel %vm208, %v119, 0
    %v234 = vsel %vm208, %v120, 0
    %v237 = vsel %vm208, %v121, 0
    %v240 = vsel %vm208, %v122, 0
    %v243 = vsel %vm208, %v123, 0
    %v246 = vsel %vm208, %v124, 0
    %v249 = vsel %vm208, %v125, 0
    %v252 = vsel %vm208, %v126, 0
    %v255 = vsel %vm208, %v127, 0
    %257 = vmatprep.subr.mxu0 0.0
    %258 = vmatpush1.msra.mxu0 0.0
    %259 = vmatprep.subr.mxu0 0.0
    %260 = vmatpush1.msra.mxu0 0.0
    %261 = vmatprep.subr.mxu0 0.0
    %262 = vmatpush1.msra.mxu0 0.0
    %263 = vmatprep.subr.mxu0 0.0
    %264 = vmatpush1.msra.mxu0 0.0
    %265 = vmatprep.subr.mxu0 0.0
    %266 = vmatpush1.msra.mxu0 0.0
    %267 = vmatprep.subr.mxu0 0.0
    %268 = vmatpush1.msra.mxu0 0.0
    %269 = vmatprep.subr.mxu0 0.0
    %270 = vmatpush1.msra.mxu0 0.0
    %271 = vmatprep.subr.mxu0 0.0
    %272 = vmatpush1.msra.mxu0 0.0
    %273 = vmatprep.subr.mxu0 0.0
    %274 = vmatpush1.msra.mxu0 0.0
    %275 = vmatprep.subr.mxu0 0.0
    %276 = vmatpush1.msra.mxu0 0.0
    %277 = vmatprep.subr.mxu0 0.0
    %278 = vmatpush1.msra.mxu0 0.0
    %279 = vmatprep.subr.mxu0 0.0
    %280 = vmatpush1.msra.mxu0 0.0
    %281 = vmatprep.subr.mxu0 0.0
    %282 = vmatpush1.msra.mxu0 0.0
    %283 = vmatprep.subr.mxu0 0.0
    %284 = vmatpush1.msra.mxu0 0.0
    %285 = vmatprep.subr.mxu0 %v49
    %286 = vmatpush1.msra.mxu0 %v48
    %287 = vmatprep.subr.mxu0 %v45
    %288 = vmatpush1.msra.mxu0 %v44
    %289 = vmatprep.subr.mxu0 0.0
    %290 = vmatpush2.msra.mxu0 0.0
    %291 = vmatprep.subr.mxu0 0.0
    %292 = vmatpush2.msra.mxu0 0.0
    %293 = vmatprep.subr.mxu0 0.0
    %294 = vmatpush2.msra.mxu0 0.0
    %295 = vmatprep.subr.mxu0 0.0
    %296 = vmatpush2.msra.mxu0 0.0
    %297 = vmatprep.subr.mxu0 0.0
    %298 = vmatpush2.msra.mxu0 0.0
    %299 = vmatprep.subr.mxu0 0.0
    %300 = vmatpush2.msra.mxu0 0.0
    %301 = vmatprep.subr.mxu0 0.0
    %302 = vmatpush2.msra.mxu0 0.0
    %303 = vmatprep.subr.mxu0 0.0
    %304 = vmatpush2.msra.mxu0 0.0
    %305 = vmatprep.subr.mxu0 0.0
    %306 = vmatpush2.msra.mxu0 0.0
    %307 = vmatprep.subr.mxu0 0.0
    %308 = vmatpush2.msra.mxu0 0.0
    %309 = vmatprep.subr.mxu0 0.0
    %310 = vmatpush2.msra.mxu0 0.0
    %311 = vmatprep.subr.mxu0 0.0
    %312 = vmatpush2.msra.mxu0 0.0
    %313 = vmatprep.subr.mxu0 0.0
    %314 = vmatpush2.msra.mxu0 0.0
    %315 = vmatprep.subr.mxu0 0.0
    %316 = vmatpush2.msra.mxu0 0.0
    %317 = vmatprep.subr.mxu0 0.0
    %318 = vmatpush2.msra.mxu0 0.0
    %319 = vmatprep.subr.mxu0 0.0
    %320 = vmatpush2.msra.mxu0 0.0
    %321 = vmatprep.mubr.f32.mxu0 0.0
    %322 = vmatmul.mubr.f32.gmra.mxu0 %v210
    %v323 = vpop.f32.mrf.mxu0
    %v324 = vadd.f32 %v131, %v323
    %v325 = vpop.f32.mrf.mxu0
    %v326 = vadd.f32 %v131, %v325
    %327 = vmatprep.mubr.f32.mxu0 0.0
    %328 = vmatmul.mubr.f32.gmra.mxu0 %v213
    %v329 = vpop.f32.mrf.mxu0
    %v330 = vadd.f32 %v136, %v329
    %v331 = vpop.f32.mrf.mxu0
    %v332 = vadd.f32 %v136, %v331
    %333 = vmatprep.mubr.f32.mxu0 0.0
    %334 = vmatmul.mubr.f32.gmra.mxu0 %v216
    %v335 = vpop.f32.mrf.mxu0
    %v336 = vadd.f32 %v141, %v335
    %v337 = vpop.f32.mrf.mxu0
    %v338 = vadd.f32 %v141, %v337
    %339 = vmatprep.mubr.f32.mxu0 0.0
    %340 = vmatmul.mubr.f32.gmra.mxu0 %v219
    %v341 = vpop.f32.mrf.mxu0
    %v342 = vadd.f32 %v146, %v341
    %v343 = vpop.f32.mrf.mxu0
    %v344 = vadd.f32 %v146, %v343
    %345 = vmatprep.mubr.f32.mxu0 0.0
    %346 = vmatmul.mubr.f32.gmra.mxu0 %v222
    %v347 = vpop.f32.mrf.mxu0
    %v348 = vadd.f32 %v151, %v347
    %v349 = vpop.f32.mrf.mxu0
    %v350 = vadd.f32 %v151, %v349
    %351 = vmatprep.mubr.f32.mxu0 0.0
    %352 = vmatmul.mubr.f32.gmra.mxu0 %v225
    %v353 = vpop.f32.mrf.mxu0
    %v354 = vadd.f32 %v156, %v353
    %v355 = vpop.f32.mrf.mxu0
    %v356 = vadd.f32 %v156, %v355
    %357 = vmatprep.mubr.f32.mxu0 0.0
    %358 = vmatmul.mubr.f32.gmra.mxu0 %v228
    %v359 = vpop.f32.mrf.mxu0
    %v360 = vadd.f32 %v161, %v359
    %v361 = vpop.f32.mrf.mxu0
    %v362 = vadd.f32 %v161, %v361
    %363 = vmatprep.mubr.f32.mxu0 0.0
    %364 = vmatmul.mubr.f32.gmra.mxu0 %v231
    %v365 = vpop.f32.mrf.mxu0
    %v366 = vadd.f32 %v166, %v365
    %v367 = vpop.f32.mrf.mxu0
    %v368 = vadd.f32 %v166, %v367
    %369 = vmatprep.mubr.f32.mxu0 0.0
    %370 = vmatmul.mubr.f32.gmra.mxu0 %v234
    %v371 = vpop.f32.mrf.mxu0
    %v372 = vadd.f32 %v171, %v371
    %v373 = vpop.f32.mrf.mxu0
    %v374 = vadd.f32 %v171, %v373
    %375 = vmatprep.mubr.f32.mxu0 0.0
    %376 = vmatmul.mubr.f32.gmra.mxu0 %v237
    %v377 = vpop.f32.mrf.mxu0
    %v378 = vadd.f32 %v176, %v377
    %v379 = vpop.f32.mrf.mxu0
    %v380 = vadd.f32 %v176, %v379
    %381 = vmatprep.mubr.f32.mxu0 0.0
    %382 = vmatmul.mubr.f32.gmra.mxu0 %v240
    %v383 = vpop.f32.mrf.mxu0
    %v384 = vadd.f32 %v181, %v383
    %v385 = vpop.f32.mrf.mxu0
    %v386 = vadd.f32 %v181, %v385
    %387 = vmatprep.mubr.f32.mxu0 0.0
    %388 = vmatmul.mubr.f32.gmra.mxu0 %v243
    %v389 = vpop.f32.mrf.mxu0
    %v390 = vadd.f32 %v186, %v389
    %v391 = vpop.f32.mrf.mxu0
    %v392 = vadd.f32 %v186, %v391
    %393 = vmatprep.mubr.f32.mxu0 0.0
    %394 = vmatmul.mubr.f32.gmra.mxu0 %v246
    %v395 = vpop.f32.mrf.mxu0
    %v396 = vadd.f32 %v191, %v395
    %v397 = vpop.f32.mrf.mxu0
    %v398 = vadd.f32 %v191, %v397
    %399 = vmatprep.mubr.f32.mxu0 0.0
    %400 = vmatmul.mubr.f32.gmra.mxu0 %v249
    %v401 = vpop.f32.mrf.mxu0
    %v402 = vadd.f32 %v196, %v401
    %v403 = vpop.f32.mrf.mxu0
    %v404 = vadd.f32 %v196, %v403
    %405 = vmatprep.mubr.f32.mxu0 0.0
    %406 = vmatmul.mubr.f32.gmra.mxu0 %v252
    %v407 = vpop.f32.mrf.mxu0
    %v408 = vadd.f32 %v201, %v407
    %v409 = vpop.f32.mrf.mxu0
    %v410 = vadd.f32 %v201, %v409
    %411 = vmatprep.mubr.f32.mxu0 0.0
    %412 = vmatmul.mubr.f32.gmra.mxu0 %v255
    %v413 = vpop.f32.mrf.mxu0
    %v414 = vadd.f32 %v206, %v413
    %v415 = vpop.f32.mrf.mxu0
    %v416 = vadd.f32 %v206, %v415
    %417 = vdwg.mxu0
    %418 = vmatprep.subr.mxu0 0.0
    %419 = vmatpush1.msra.mxu0 0.0
    %420 = vmatprep.subr.mxu0 0.0
    %421 = vmatpush1.msra.mxu0 0.0
    %422 = vmatprep.subr.mxu0 0.0
    %423 = vmatpush1.msra.mxu0 0.0
    %424 = vmatprep.subr.mxu0 0.0
    %425 = vmatpush1.msra.mxu0 0.0
    %426 = vmatprep.subr.mxu0 0.0
    %427 = vmatpush1.msra.mxu0 0.0
    %428 = vmatprep.subr.mxu0 0.0
    %429 = vmatpush1.msra.mxu0 0.0
    %430 = vmatprep.subr.mxu0 0.0
    %431 = vmatpush1.msra.mxu0 0.0
    %432 = vmatprep.subr.mxu0 0.0
    %433 = vmatpush1.msra.mxu0 0.0
    %434 = vmatprep.subr.mxu0 0.0
    %435 = vmatpush1.msra.mxu0 0.0
    %436 = vmatprep.subr.mxu0 0.0
    %437 = vmatpush1.msra.mxu0 0.0
    %438 = vmatprep.subr.mxu0 0.0
    %439 = vmatpush1.msra.mxu0 0.0
    %440 = vmatprep.subr.mxu0 0.0
    %441 = vmatpush1.msra.mxu0 0.0
    %442 = vmatprep.subr.mxu0 0.0
    %443 = vmatpush1.msra.mxu0 0.0
    %444 = vmatprep.subr.mxu0 0.0
    %445 = vmatpush1.msra.mxu0 0.0
    %446 = vmatprep.subr.mxu0 %v51
    %447 = vmatpush1.msra.mxu0 %v50
    %448 = vmatprep.subr.mxu0 %v47
    %449 = vmatpush1.msra.mxu0 %v46
    %450 = vmatprep.subr.mxu0 0.0
    %451 = vmatpush2.msra.mxu0 0.0
    %452 = vmatprep.subr.mxu0 0.0
    %453 = vmatpush2.msra.mxu0 0.0
    %454 = vmatprep.subr.mxu0 0.0
    %455 = vmatpush2.msra.mxu0 0.0
    %456 = vmatprep.subr.mxu0 0.0
    %457 = vmatpush2.msra.mxu0 0.0
    %458 = vmatprep.subr.mxu0 0.0
    %459 = vmatpush2.msra.mxu0 0.0
    %460 = vmatprep.subr.mxu0 0.0
    %461 = vmatpush2.msra.mxu0 0.0
    %462 = vmatprep.subr.mxu0 0.0
    %463 = vmatpush2.msra.mxu0 0.0
    %464 = vmatprep.subr.mxu0 0.0
    %465 = vmatpush2.msra.mxu0 0.0
    %466 = vmatprep.subr.mxu0 0.0
    %467 = vmatpush2.msra.mxu0 0.0
    %468 = vmatprep.subr.mxu0 0.0
    %469 = vmatpush2.msra.mxu0 0.0
    %470 = vmatprep.subr.mxu0 0.0
    %471 = vmatpush2.msra.mxu0 0.0
    %472 = vmatprep.subr.mxu0 0.0
    %473 = vmatpush2.msra.mxu0 0.0
    %474 = vmatprep.subr.mxu0 0.0
    %475 = vmatpush2.msra.mxu0 0.0
    %476 = vmatprep.subr.mxu0 0.0
    %477 = vmatpush2.msra.mxu0 0.0
    %478 = vmatprep.subr.mxu0 0.0
    %479 = vmatpush2.msra.mxu0 0.0
    %480 = vmatprep.subr.mxu0 0.0
    %481 = vmatpush2.msra.mxu0 0.0
    %482 = vmatprep.mubr.f32.mxu0 0.0
    %483 = vmatmul.mubr.f32.gmra.mxu0 %v210
    %v484 = vpop.f32.mrf.mxu0
    %v485 = vadd.f32 %v131, %v484
    %v486 = vpop.f32.mrf.mxu0
    %v487 = vadd.f32 %v131, %v486
    %488 = vmatprep.mubr.f32.mxu0 0.0
    %489 = vmatmul.mubr.f32.gmra.mxu0 %v213
    %v490 = vpop.f32.mrf.mxu0
    %v491 = vadd.f32 %v136, %v490
    %v492 = vpop.f32.mrf.mxu0
    %v493 = vadd.f32 %v136, %v492
    %494 = vmatprep.mubr.f32.mxu0 0.0
    %495 = vmatmul.mubr.f32.gmra.mxu0 %v216
    %v496 = vpop.f32.mrf.mxu0
    %v497 = vadd.f32 %v141, %v496
    %v498 = vpop.f32.mrf.mxu0
    %v499 = vadd.f32 %v141, %v498
    %500 = vmatprep.mubr.f32.mxu0 0.0
    %501 = vmatmul.mubr.f32.gmra.mxu0 %v219
    %v502 = vpop.f32.mrf.mxu0
    %v503 = vadd.f32 %v146, %v502
    %v504 = vpop.f32.mrf.mxu0
    %v505 = vadd.f32 %v146, %v504
    %506 = vmatprep.mubr.f32.mxu0 0.0
    %507 = vmatmul.mubr.f32.gmra.mxu0 %v222
    %v508 = vpop.f32.mrf.mxu0
    %v509 = vadd.f32 %v151, %v508
    %v510 = vpop.f32.mrf.mxu0
    %v511 = vadd.f32 %v151, %v510
    %512 = vmatprep.mubr.f32.mxu0 0.0
    %513 = vmatmul.mubr.f32.gmra.mxu0 %v225
    %v514 = vpop.f32.mrf.mxu0
    %v515 = vadd.f32 %v156, %v514
    %v516 = vpop.f32.mrf.mxu0
    %v517 = vadd.f32 %v156, %v516
    %518 = vmatprep.mubr.f32.mxu0 0.0
    %519 = vmatmul.mubr.f32.gmra.mxu0 %v228
    %v520 = vpop.f32.mrf.mxu0
    %v521 = vadd.f32 %v161, %v520
    %v522 = vpop.f32.mrf.mxu0
    %v523 = vadd.f32 %v161, %v522
    %524 = vmatprep.mubr.f32.mxu0 0.0
    %525 = vmatmul.mubr.f32.gmra.mxu0 %v231
    %v526 = vpop.f32.mrf.mxu0
    %v527 = vadd.f32 %v166, %v526
    %v528 = vpop.f32.mrf.mxu0
    %v529 = vadd.f32 %v166, %v528
    %530 = vmatprep.mubr.f32.mxu0 0.0
    %531 = vmatmul.mubr.f32.gmra.mxu0 %v234
    %v532 = vpop.f32.mrf.mxu0
    %v533 = vadd.f32 %v171, %v532
    %v534 = vpop.f32.mrf.mxu0
    %v535 = vadd.f32 %v171, %v534
    %536 = vmatprep.mubr.f32.mxu0 0.0
    %537 = vmatmul.mubr.f32.gmra.mxu0 %v237
    %v538 = vpop.f32.mrf.mxu0
    %v539 = vadd.f32 %v176, %v538
    %v540 = vpop.f32.mrf.mxu0
    %v541 = vadd.f32 %v176, %v540
    %542 = vmatprep.mubr.f32.mxu0 0.0
    %543 = vmatmul.mubr.f32.gmra.mxu0 %v240
    %v544 = vpop.f32.mrf.mxu0
    %v545 = vadd.f32 %v181, %v544
    %v546 = vpop.f32.mrf.mxu0
    %v547 = vadd.f32 %v181, %v546
    %548 = vmatprep.mubr.f32.mxu0 0.0
    %549 = vmatmul.mubr.f32.gmra.mxu0 %v243
    %v550 = vpop.f32.mrf.mxu0
    %v551 = vadd.f32 %v186, %v550
    %v552 = vpop.f32.mrf.mxu0
    %v553 = vadd.f32 %v186, %v552
    %554 = vmatprep.mubr.f32.mxu0 0.0
    %555 = vmatmul.mubr.f32.gmra.mxu0 %v246
    %v556 = vpop.f32.mrf.mxu0
    %v557 = vadd.f32 %v191, %v556
    %v558 = vpop.f32.mrf.mxu0
    %v559 = vadd.f32 %v191, %v558
    %560 = vmatprep.mubr.f32.mxu0 0.0
    %561 = vmatmul.mubr.f32.gmra.mxu0 %v249
    %v562 = vpop.f32.mrf.mxu0
    %v563 = vadd.f32 %v196, %v562
    %v564 = vpop.f32.mrf.mxu0
    %v565 = vadd.f32 %v196, %v564
    %566 = vmatprep.mubr.f32.mxu0 0.0
    %567 = vmatmul.mubr.f32.gmra.mxu0 %v252
    %v568 = vpop.f32.mrf.mxu0
    %v569 = vadd.f32 %v201, %v568
    %v570 = vpop.f32.mrf.mxu0
    %v571 = vadd.f32 %v201, %v570
    %572 = vmatprep.mubr.f32.mxu0 0.0
    %573 = vmatmul.mubr.f32.gmra.mxu0 %v255
    %v574 = vpop.f32.mrf.mxu0
    %v575 = vadd.f32 %v206, %v574
    %v576 = vpop.f32.mrf.mxu0
    %v577 = vadd.f32 %v206, %v576
    %578 = vdwg.mxu0
    %v579 = vmul.f32 %v324, 0.1
    %v580 = vmul.f32 %v326, 0.1
    %v581 = vmul.f32 %v485, 0.1
    %v582 = vmul.f32 %v487, 0.1
    %v583 = vmul.f32 %v330, 0.1
    %v584 = vmul.f32 %v332, 0.1
    %v585 = vmul.f32 %v491, 0.1
    %v586 = vmul.f32 %v493, 0.1
    %v587 = vmul.f32 %v336, 0.1
    %v588 = vmul.f32 %v338, 0.1
    %v589 = vmul.f32 %v497, 0.1
    %v590 = vmul.f32 %v499, 0.1
    %v591 = vmul.f32 %v342, 0.1
    %v592 = vmul.f32 %v344, 0.1
    %v593 = vmul.f32 %v503, 0.1
    %v594 = vmul.f32 %v505, 0.1
    %v595 = vmul.f32 %v348, 0.1
    %v596 = vmul.f32 %v350, 0.1
    %v597 = vmul.f32 %v509, 0.1
    %v598 = vmul.f32 %v511, 0.1
    %v599 = vmul.f32 %v354, 0.1
    %v600 = vmul.f32 %v356, 0.1
    %v601 = vmul.f32 %v515, 0.1
    %v602 = vmul.f32 %v517, 0.1
    %v603 = vmul.f32 %v360, 0.1
    %v604 = vmul.f32 %v362, 0.1
    %v605 = vmul.f32 %v521, 0.1
    %v606 = vmul.f32 %v523, 0.1
    %v607 = vmul.f32 %v366, 0.1
    %v608 = vmul.f32 %v368, 0.1
    %v609 = vmul.f32 %v527, 0.1
    %v610 = vmul.f32 %v529, 0.1
    %v611 = vmul.f32 %v372, 0.1
    %v612 = vmul.f32 %v374, 0.1
    %v613 = vmul.f32 %v533, 0.1
    %v614 = vmul.f32 %v535, 0.1
    %v615 = vmul.f32 %v378, 0.1
    %v616 = vmul.f32 %v380, 0.1
    %v617 = vmul.f32 %v539, 0.1
    %v618 = vmul.f32 %v541, 0.1
    %v619 = vmul.f32 %v384, 0.1
    %v620 = vmul.f32 %v386, 0.1
    %v621 = vmul.f32 %v545, 0.1
    %v622 = vmul.f32 %v547, 0.1
    %v623 = vmul.f32 %v390, 0.1
    %v624 = vmul.f32 %v392, 0.1
    %v625 = vmul.f32 %v551, 0.1
    %v626 = vmul.f32 %v553, 0.1
    %v627 = vmul.f32 %v396, 0.1
    %v628 = vmul.f32 %v398, 0.1
    %v629 = vmul.f32 %v557, 0.1
    %v630 = vmul.f32 %v559, 0.1
    %v631 = vmul.f32 %v402, 0.1
    %v632 = vmul.f32 %v404, 0.1
    %v633 = vmul.f32 %v563, 0.1
    %v634 = vmul.f32 %v565, 0.1
    %v635 = vmul.f32 %v408, 0.1
    %v636 = vmul.f32 %v410, 0.1
    %v637 = vmul.f32 %v569, 0.1
    %v638 = vmul.f32 %v571, 0.1
    %v639 = vmul.f32 %v414, 0.1
    %v640 = vmul.f32 %v416, 0.1
    %v641 = vmul.f32 %v575, 0.1
    %v642 = vmul.f32 %v577, 0.1
    %v643 = vmax.f32 %v324, %v579
    %v644 = vmax.f32 %v326, %v580
    %v645 = vmax.f32 %v485, %v581
    %v646 = vmax.f32 %v487, %v582
    %v647 = vmax.f32 %v330, %v583
    %v648 = vmax.f32 %v332, %v584
    %v649 = vmax.f32 %v491, %v585
    %v650 = vmax.f32 %v493, %v586
    %v651 = vmax.f32 %v336, %v587
    %v652 = vmax.f32 %v338, %v588
    %v653 = vmax.f32 %v497, %v589
    %v654 = vmax.f32 %v499, %v590
    %v655 = vmax.f32 %v342, %v591
    %v656 = vmax.f32 %v344, %v592
    %v657 = vmax.f32 %v503, %v593
    %v658 = vmax.f32 %v505, %v594
    %v659 = vmax.f32 %v348, %v595
    %v660 = vmax.f32 %v350, %v596
    %v661 = vmax.f32 %v509, %v597
    %v662 = vmax.f32 %v511, %v598
    %v663 = vmax.f32 %v354, %v599
    %v664 = vmax.f32 %v356, %v600
    %v665 = vmax.f32 %v515, %v601
    %v666 = vmax.f32 %v517, %v602
    %v667 = vmax.f32 %v360, %v603
    %v668 = vmax.f32 %v362, %v604
    %v669 = vmax.f32 %v521, %v605
    %v670 = vmax.f32 %v523, %v606
    %v671 = vmax.f32 %v366, %v607
    %v672 = vmax.f32 %v368, %v608
    %v673 = vmax.f32 %v527, %v609
    %v674 = vmax.f32 %v529, %v610
    %v675 = vmax.f32 %v372, %v611
    %v676 = vmax.f32 %v374, %v612
    %v677 = vmax.f32 %v533, %v613
    %v678 = vmax.f32 %v535, %v614
    %v679 = vmax.f32 %v378, %v615
    %v680 = vmax.f32 %v380, %v616
    %v681 = vmax.f32 %v539, %v617
    %v682 = vmax.f32 %v541, %v618
    %v683 = vmax.f32 %v384, %v619
    %v684 = vmax.f32 %v386, %v620
    %v685 = vmax.f32 %v545, %v621
    %v686 = vmax.f32 %v547, %v622
    %v687 = vmax.f32 %v390, %v623
    %v688 = vmax.f32 %v392, %v624
    %v689 = vmax.f32 %v551, %v625
    %v690 = vmax.f32 %v553, %v626
    %v691 = vmax.f32 %v396, %v627
    %v692 = vmax.f32 %v398, %v628
    %v693 = vmax.f32 %v557, %v629
    %v694 = vmax.f32 %v559, %v630
    %v695 = vmax.f32 %v402, %v631
    %v696 = vmax.f32 %v404, %v632
    %v697 = vmax.f32 %v563, %v633
    %v698 = vmax.f32 %v565, %v634
    %v699 = vmax.f32 %v408, %v635
    %v700 = vmax.f32 %v410, %v636
    %v701 = vmax.f32 %v569, %v637
    %v702 = vmax.f32 %v571, %v638
    %v703 = vmax.f32 %v414, %v639
    %v704 = vmax.f32 %v416, %v640
    %v705 = vmax.f32 %v575, %v641
    %v706 = vmax.f32 %v577, %v642
    %v707 = vld [vmem:[%s3] sm:$0xff]
    %v708 = vld [vmem:[%s3 + $0x8] sm:$0xff]
    %v709 = vld [vmem:[%s3 + $0x10] sm:$0xff]
    %v710 = vld [vmem:[%s3 + $0x18] sm:$0xff]
    %v711 = vld [vmem:[%s3 + $0x20] sm:$0xff]
    %v712 = vld [vmem:[%s3 + $0x28] sm:$0xff]
    %v713 = vld [vmem:[%s3 + $0x30] sm:$0xff]
    %v714 = vld [vmem:[%s3 + $0x38] sm:$0xff]
    %v715 = vld [vmem:[%s3 + $0x40] sm:$0xff]
    %v716 = vld [vmem:[%s3 + $0x48] sm:$0xff]
    %v717 = vld [vmem:[%s3 + $0x50] sm:$0xff]
    %v718 = vld [vmem:[%s3 + $0x58] sm:$0xff]
    %v719 = vld [vmem:[%s3 + $0x60] sm:$0xff]
    %v720 = vld [vmem:[%s3 + $0x68] sm:$0xff]
    %v721 = vld [vmem:[%s3 + $0x70] sm:$0xff]
    %v722 = vld [vmem:[%s3 + $0x78] sm:$0xff]
    %724 = vset.pattern.permute.xlu0 0
    %725 = vperm.xlu0 %724, %v76
    %v726 = vpop.permute.xlu0 %725
    %729 = vset.pattern.permute.xlu0 0
    %730 = vperm.xlu0 %729, %v77
    %v731 = vpop.permute.xlu0 %730
    %734 = vset.pattern.permute.xlu0 0
    %735 = vperm.xlu0 %734, %v78
    %v736 = vpop.permute.xlu0 %735
    %739 = vset.pattern.permute.xlu0 0
    %740 = vperm.xlu0 %739, %v79
    %v741 = vpop.permute.xlu0 %740
    %744 = vset.pattern.permute.xlu0 0
    %745 = vperm.xlu0 %744, %v80
    %v746 = vpop.permute.xlu0 %745
    %749 = vset.pattern.permute.xlu0 0
    %750 = vperm.xlu0 %749, %v81
    %v751 = vpop.permute.xlu0 %750
    %754 = vset.pattern.permute.xlu0 0
    %755 = vperm.xlu0 %754, %v82
    %v756 = vpop.permute.xlu0 %755
    %759 = vset.pattern.permute.xlu0 0
    %760 = vperm.xlu0 %759, %v83
    %v761 = vpop.permute.xlu0 %760
    %764 = vset.pattern.permute.xlu0 0
    %765 = vperm.xlu0 %764, %v84
    %v766 = vpop.permute.xlu0 %765
    %769 = vset.pattern.permute.xlu0 0
    %770 = vperm.xlu0 %769, %v85
    %v771 = vpop.permute.xlu0 %770
    %774 = vset.pattern.permute.xlu0 0
    %775 = vperm.xlu0 %774, %v86
    %v776 = vpop.permute.xlu0 %775
    %779 = vset.pattern.permute.xlu0 0
    %780 = vperm.xlu0 %779, %v87
    %v781 = vpop.permute.xlu0 %780
    %784 = vset.pattern.permute.xlu0 0
    %785 = vperm.xlu0 %784, %v88
    %v786 = vpop.permute.xlu0 %785
    %789 = vset.pattern.permute.xlu0 0
    %790 = vperm.xlu0 %789, %v89
    %v791 = vpop.permute.xlu0 %790
    %794 = vset.pattern.permute.xlu0 0
    %795 = vperm.xlu0 %794, %v90
    %v796 = vpop.permute.xlu0 %795
    %799 = vset.pattern.permute.xlu0 0
    %800 = vperm.xlu0 %799, %v91
    %v801 = vpop.permute.xlu0 %800
    %803 = vmatprep.subr.mxu0 %v704
    %804 = vmatpush1.msra.mxu0 %v703
    %805 = vmatprep.subr.mxu0 %v700
    %806 = vmatpush1.msra.mxu0 %v699
    %807 = vmatprep.subr.mxu0 %v696
    %808 = vmatpush1.msra.mxu0 %v695
    %809 = vmatprep.subr.mxu0 %v692
    %810 = vmatpush1.msra.mxu0 %v691
    %811 = vmatprep.subr.mxu0 %v688
    %812 = vmatpush1.msra.mxu0 %v687
    %813 = vmatprep.subr.mxu0 %v684
    %814 = vmatpush1.msra.mxu0 %v683
    %815 = vmatprep.subr.mxu0 %v680
    %816 = vmatpush1.msra.mxu0 %v679
    %817 = vmatprep.subr.mxu0 %v676
    %818 = vmatpush1.msra.mxu0 %v675
    %819 = vmatprep.subr.mxu0 %v672
    %820 = vmatpush1.msra.mxu0 %v671
    %821 = vmatprep.subr.mxu0 %v668
    %822 = vmatpush1.msra.mxu0 %v667
    %823 = vmatprep.subr.mxu0 %v664
    %824 = vmatpush1.msra.mxu0 %v663
    %825 = vmatprep.subr.mxu0 %v660
    %826 = vmatpush1.msra.mxu0 %v659
    %827 = vmatprep.subr.mxu0 %v656
    %828 = vmatpush1.msra.mxu0 %v655
    %829 = vmatprep.subr.mxu0 %v652
    %830 = vmatpush1.msra.mxu0 %v651
    %831 = vmatprep.subr.mxu0 %v648
    %832 = vmatpush1.msra.mxu0 %v647
    %833 = vmatprep.subr.mxu0 %v644
    %834 = vmatpush1.msra.mxu0 %v643
    %835 = vmatprep.subr.mxu0 0.0
    %836 = vmatpush2.msra.mxu0 0.0
    %837 = vmatprep.subr.mxu0 0.0
    %838 = vmatpush2.msra.mxu0 0.0
    %839 = vmatprep.subr.mxu0 0.0
    %840 = vmatpush2.msra.mxu0 0.0
    %841 = vmatprep.subr.mxu0 0.0
    %842 = vmatpush2.msra.mxu0 0.0
    %843 = vmatprep.subr.mxu0 0.0
    %844 = vmatpush2.msra.mxu0 0.0
    %845 = vmatprep.subr.mxu0 0.0
    %846 = vmatpush2.msra.mxu0 0.0
    %847 = vmatprep.subr.mxu0 0.0
    %848 = vmatpush2.msra.mxu0 0.0
    %849 = vmatprep.subr.mxu0 0.0
    %850 = vmatpush2.msra.mxu0 0.0
    %851 = vmatprep.subr.mxu0 0.0
    %852 = vmatpush2.msra.mxu0 0.0
    %853 = vmatprep.subr.mxu0 0.0
    %854 = vmatpush2.msra.mxu0 0.0
    %855 = vmatprep.subr.mxu0 0.0
    %856 = vmatpush2.msra.mxu0 0.0
    %857 = vmatprep.subr.mxu0 0.0
    %858 = vmatpush2.msra.mxu0 0.0
    %859 = vmatprep.subr.mxu0 0.0
    %860 = vmatpush2.msra.mxu0 0.0
    %861 = vmatprep.subr.mxu0 0.0
    %862 = vmatpush2.msra.mxu0 0.0
    %863 = vmatprep.subr.mxu0 0.0
    %864 = vmatpush2.msra.mxu0 0.0
    %865 = vmatprep.subr.mxu0 0.0
    %866 = vmatpush2.msra.mxu0 0.0
    %867 = vmatprep.mubr.f32.mxu0 0.0
    %868 = vmatmul.mubr.f32.gmra.mxu0 %v707
    %v869 = vpop.f32.mrf.mxu0
    %v870 = vadd.f32 %v726, %v869
    %v871 = vpop.f32.mrf.mxu0
    %v872 = vadd.f32 %v726, %v871
    %873 = vmatprep.mubr.f32.mxu0 0.0
    %874 = vmatmul.mubr.f32.gmra.mxu0 %v708
    %v875 = vpop.f32.mrf.mxu0
    %v876 = vadd.f32 %v731, %v875
    %v877 = vpop.f32.mrf.mxu0
    %v878 = vadd.f32 %v731, %v877
    %879 = vmatprep.mubr.f32.mxu0 0.0
    %880 = vmatmul.mubr.f32.gmra.mxu0 %v709
    %v881 = vpop.f32.mrf.mxu0
    %v882 = vadd.f32 %v736, %v881
    %v883 = vpop.f32.mrf.mxu0
    %v884 = vadd.f32 %v736, %v883
    %885 = vmatprep.mubr.f32.mxu0 0.0
    %886 = vmatmul.mubr.f32.gmra.mxu0 %v710
    %v887 = vpop.f32.mrf.mxu0
    %v888 = vadd.f32 %v741, %v887
    %v889 = vpop.f32.mrf.mxu0
    %v890 = vadd.f32 %v741, %v889
    %891 = vmatprep.mubr.f32.mxu0 0.0
    %892 = vmatmul.mubr.f32.gmra.mxu0 %v711
    %v893 = vpop.f32.mrf.mxu0
    %v894 = vadd.f32 %v746, %v893
    %v895 = vpop.f32.mrf.mxu0
    %v896 = vadd.f32 %v746, %v895
    %897 = vmatprep.mubr.f32.mxu0 0.0
    %898 = vmatmul.mubr.f32.gmra.mxu0 %v712
    %v899 = vpop.f32.mrf.mxu0
    %v900 = vadd.f32 %v751, %v899
    %v901 = vpop.f32.mrf.mxu0
    %v902 = vadd.f32 %v751, %v901
    %903 = vmatprep.mubr.f32.mxu0 0.0
    %904 = vmatmul.mubr.f32.gmra.mxu0 %v713
    %v905 = vpop.f32.mrf.mxu0
    %v906 = vadd.f32 %v756, %v905
    %v907 = vpop.f32.mrf.mxu0
    %v908 = vadd.f32 %v756, %v907
    %909 = vmatprep.mubr.f32.mxu0 0.0
    %910 = vmatmul.mubr.f32.gmra.mxu0 %v714
    %v911 = vpop.f32.mrf.mxu0
    %v912 = vadd.f32 %v761, %v911
    %v913 = vpop.f32.mrf.mxu0
    %v914 = vadd.f32 %v761, %v913
    %915 = vmatprep.mubr.f32.mxu0 0.0
    %916 = vmatmul.mubr.f32.gmra.mxu0 %v715
    %v917 = vpop.f32.mrf.mxu0
    %v918 = vadd.f32 %v766, %v917
    %v919 = vpop.f32.mrf.mxu0
    %v920 = vadd.f32 %v766, %v919
    %921 = vmatprep.mubr.f32.mxu0 0.0
    %922 = vmatmul.mubr.f32.gmra.mxu0 %v716
    %v923 = vpop.f32.mrf.mxu0
    %v924 = vadd.f32 %v771, %v923
    %v925 = vpop.f32.mrf.mxu0
    %v926 = vadd.f32 %v771, %v925
    %927 = vmatprep.mubr.f32.mxu0 0.0
    %928 = vmatmul.mubr.f32.gmra.mxu0 %v717
    %v929 = vpop.f32.mrf.mxu0
    %v930 = vadd.f32 %v776, %v929
    %v931 = vpop.f32.mrf.mxu0
    %v932 = vadd.f32 %v776, %v931
    %933 = vmatprep.mubr.f32.mxu0 0.0
    %934 = vmatmul.mubr.f32.gmra.mxu0 %v718
    %v935 = vpop.f32.mrf.mxu0
    %v936 = vadd.f32 %v781, %v935
    %v937 = vpop.f32.mrf.mxu0
    %v938 = vadd.f32 %v781, %v937
    %939 = vmatprep.mubr.f32.mxu0 0.0
    %940 = vmatmul.mubr.f32.gmra.mxu0 %v719
    %v941 = vpop.f32.mrf.mxu0
    %v942 = vadd.f32 %v786, %v941
    %v943 = vpop.f32.mrf.mxu0
    %v944 = vadd.f32 %v786, %v943
    %945 = vmatprep.mubr.f32.mxu0 0.0
    %946 = vmatmul.mubr.f32.gmra.mxu0 %v720
    %v947 = vpop.f32.mrf.mxu0
    %v948 = vadd.f32 %v791, %v947
    %v949 = vpop.f32.mrf.mxu0
    %v950 = vadd.f32 %v791, %v949
    %951 = vmatprep.mubr.f32.mxu0 0.0
    %952 = vmatmul.mubr.f32.gmra.mxu0 %v721
    %v953 = vpop.f32.mrf.mxu0
    %v954 = vadd.f32 %v796, %v953
    %v955 = vpop.f32.mrf.mxu0
    %v956 = vadd.f32 %v796, %v955
    %957 = vmatprep.mubr.f32.mxu0 0.0
    %958 = vmatmul.mubr.f32.gmra.mxu0 %v722
    %v959 = vpop.f32.mrf.mxu0
    %v960 = vadd.f32 %v801, %v959
    %v961 = vpop.f32.mrf.mxu0
    %v962 = vadd.f32 %v801, %v961
    %963 = vdwg.mxu0
    %964 = vmatprep.subr.mxu0 %v706
    %965 = vmatpush1.msra.mxu0 %v705
    %966 = vmatprep.subr.mxu0 %v702
    %967 = vmatpush1.msra.mxu0 %v701
    %968 = vmatprep.subr.mxu0 %v698
    %969 = vmatpush1.msra.mxu0 %v697
    %970 = vmatprep.subr.mxu0 %v694
    %971 = vmatpush1.msra.mxu0 %v693
    %972 = vmatprep.subr.mxu0 %v690
    %973 = vmatpush1.msra.mxu0 %v689
    %974 = vmatprep.subr.mxu0 %v686
    %975 = vmatpush1.msra.mxu0 %v685
    %976 = vmatprep.subr.mxu0 %v682
    %977 = vmatpush1.msra.mxu0 %v681
    %978 = vmatprep.subr.mxu0 %v678
    %979 = vmatpush1.msra.mxu0 %v677
    %980 = vmatprep.subr.mxu0 %v674
    %981 = vmatpush1.msra.mxu0 %v673
    %982 = vmatprep.subr.mxu0 %v670
    %983 = vmatpush1.msra.mxu0 %v669
    %984 = vmatprep.subr.mxu0 %v666
    %985 = vmatpush1.msra.mxu0 %v665
    %986 = vmatprep.subr.mxu0 %v662
    %987 = vmatpush1.msra.mxu0 %v661
    %988 = vmatprep.subr.mxu0 %v658
    %989 = vmatpush1.msra.mxu0 %v657
    %990 = vmatprep.subr.mxu0 %v654
    %991 = vmatpush1.msra.mxu0 %v653
    %992 = vmatprep.subr.mxu0 %v650
    %993 = vmatpush1.msra.mxu0 %v649
    %994 = vmatprep.subr.mxu0 %v646
    %995 = vmatpush1.msra.mxu0 %v645
    %996 = vmatprep.subr.mxu0 0.0
    %997 = vmatpush2.msra.mxu0 0.0
    %998 = vmatprep.subr.mxu0 0.0
    %999 = vmatpush2.msra.mxu0 0.0
    %1000 = vmatprep.subr.mxu0 0.0
    %1001 = vmatpush2.msra.mxu0 0.0
    %1002 = vmatprep.subr.mxu0 0.0
    %1003 = vmatpush2.msra.mxu0 0.0
    %1004 = vmatprep.subr.mxu0 0.0
    %1005 = vmatpush2.msra.mxu0 0.0
    %1006 = vmatprep.subr.mxu0 0.0
    %1007 = vmatpush2.msra.mxu0 0.0
    %1008 = vmatprep.subr.mxu0 0.0
    %1009 = vmatpush2.msra.mxu0 0.0
    %1010 = vmatprep.subr.mxu0 0.0
    %1011 = vmatpush2.msra.mxu0 0.0
    %1012 = vmatprep.subr.mxu0 0.0
    %1013 = vmatpush2.msra.mxu0 0.0
    %1014 = vmatprep.subr.mxu0 0.0
    %1015 = vmatpush2.msra.mxu0 0.0
    %1016 = vmatprep.subr.mxu0 0.0
    %1017 = vmatpush2.msra.mxu0 0.0
    %1018 = vmatprep.subr.mxu0 0.0
    %1019 = vmatpush2.msra.mxu0 0.0
    %1020 = vmatprep.subr.mxu0 0.0
    %1021 = vmatpush2.msra.mxu0 0.0
    %1022 = vmatprep.subr.mxu0 0.0
    %1023 = vmatpush2.msra.mxu0 0.0
    %1024 = vmatprep.subr.mxu0 0.0
    %1025 = vmatpush2.msra.mxu0 0.0
    %1026 = vmatprep.subr.mxu0 0.0
    %1027 = vmatpush2.msra.mxu0 0.0
    %1028 = vmatprep.mubr.f32.mxu0 0.0
    %1029 = vmatmul.mubr.f32.gmra.mxu0 %v707
    %v1030 = vpop.f32.mrf.mxu0
    %v1031 = vadd.f32 %v726, %v1030
    %v1032 = vpop.f32.mrf.mxu0
    %v1033 = vadd.f32 %v726, %v1032
    %1034 = vmatprep.mubr.f32.mxu0 0.0
    %1035 = vmatmul.mubr.f32.gmra.mxu0 %v708
    %v1036 = vpop.f32.mrf.mxu0
    %v1037 = vadd.f32 %v731, %v1036
    %v1038 = vpop.f32.mrf.mxu0
    %v1039 = vadd.f32 %v731, %v1038
    %1040 = vmatprep.mubr.f32.mxu0 0.0
    %1041 = vmatmul.mubr.f32.gmra.mxu0 %v709
    %v1042 = vpop.f32.mrf.mxu0
    %v1043 = vadd.f32 %v736, %v1042
    %v1044 = vpop.f32.mrf.mxu0
    %v1045 = vadd.f32 %v736, %v1044
    %1046 = vmatprep.mubr.f32.mxu0 0.0
    %1047 = vmatmul.mubr.f32.gmra.mxu0 %v710
    %v1048 = vpop.f32.mrf.mxu0
    %v1049 = vadd.f32 %v741, %v1048
    %v1050 = vpop.f32.mrf.mxu0
    %v1051 = vadd.f32 %v741, %v1050
    %1052 = vmatprep.mubr.f32.mxu0 0.0
    %1053 = vmatmul.mubr.f32.gmra.mxu0 %v711
    %v1054 = vpop.f32.mrf.mxu0
    %v1055 = vadd.f32 %v746, %v1054
    %v1056 = vpop.f32.mrf.mxu0
    %v1057 = vadd.f32 %v746, %v1056
    %1058 = vmatprep.mubr.f32.mxu0 0.0
    %1059 = vmatmul.mubr.f32.gmra.mxu0 %v712
    %v1060 = vpop.f32.mrf.mxu0
    %v1061 = vadd.f32 %v751, %v1060
    %v1062 = vpop.f32.mrf.mxu0
    %v1063 = vadd.f32 %v751, %v1062
    %1064 = vmatprep.mubr.f32.mxu0 0.0
    %1065 = vmatmul.mubr.f32.gmra.mxu0 %v713
    %v1066 = vpop.f32.mrf.mxu0
    %v1067 = vadd.f32 %v756, %v1066
    %v1068 = vpop.f32.mrf.mxu0
    %v1069 = vadd.f32 %v756, %v1068
    %1070 = vmatprep.mubr.f32.mxu0 0.0
    %1071 = vmatmul.mubr.f32.gmra.mxu0 %v714
    %v1072 = vpop.f32.mrf.mxu0
    %v1073 = vadd.f32 %v761, %v1072
    %v1074 = vpop.f32.mrf.mxu0
    %v1075 = vadd.f32 %v761, %v1074
    %1076 = vmatprep.mubr.f32.mxu0 0.0
    %1077 = vmatmul.mubr.f32.gmra.mxu0 %v715
    %v1078 = vpop.f32.mrf.mxu0
    %v1079 = vadd.f32 %v766, %v1078
    %v1080 = vpop.f32.mrf.mxu0
    %v1081 = vadd.f32 %v766, %v1080
    %1082 = vmatprep.mubr.f32.mxu0 0.0
    %1083 = vmatmul.mubr.f32.gmra.mxu0 %v716
    %v1084 = vpop.f32.mrf.mxu0
    %v1085 = vadd.f32 %v771, %v1084
    %v1086 = vpop.f32.mrf.mxu0
    %v1087 = vadd.f32 %v771, %v1086
    %1088 = vmatprep.mubr.f32.mxu0 0.0
    %1089 = vmatmul.mubr.f32.gmra.mxu0 %v717
    %v1090 = vpop.f32.mrf.mxu0
    %v1091 = vadd.f32 %v776, %v1090
    %v1092 = vpop.f32.mrf.mxu0
    %v1093 = vadd.f32 %v776, %v1092
    %1094 = vmatprep.mubr.f32.mxu0 0.0
    %1095 = vmatmul.mubr.f32.gmra.mxu0 %v718
    %v1096 = vpop.f32.mrf.mxu0
    %v1097 = vadd.f32 %v781, %v1096
    %v1098 = vpop.f32.mrf.mxu0
    %v1099 = vadd.f32 %v781, %v1098
    %1100 = vmatprep.mubr.f32.mxu0 0.0
    %1101 = vmatmul.mubr.f32.gmra.mxu0 %v719
    %v1102 = vpop.f32.mrf.mxu0
    %v1103 = vadd.f32 %v786, %v1102
    %v1104 = vpop.f32.mrf.mxu0
    %v1105 = vadd.f32 %v786, %v1104
    %1106 = vmatprep.mubr.f32.mxu0 0.0
    %1107 = vmatmul.mubr.f32.gmra.mxu0 %v720
    %v1108 = vpop.f32.mrf.mxu0
    %v1109 = vadd.f32 %v791, %v1108
    %v1110 = vpop.f32.mrf.mxu0
    %v1111 = vadd.f32 %v791, %v1110
    %1112 = vmatprep.mubr.f32.mxu0 0.0
    %1113 = vmatmul.mubr.f32.gmra.mxu0 %v721
    %v1114 = vpop.f32.mrf.mxu0
    %v1115 = vadd.f32 %v796, %v1114
    %v1116 = vpop.f32.mrf.mxu0
    %v1117 = vadd.f32 %v796, %v1116
    %1118 = vmatprep.mubr.f32.mxu0 0.0
    %1119 = vmatmul.mubr.f32.gmra.mxu0 %v722
    %v1120 = vpop.f32.mrf.mxu0
    %v1121 = vadd.f32 %v801, %v1120
    %v1122 = vpop.f32.mrf.mxu0
    %v1123 = vadd.f32 %v801, %v1122
    %1124 = vdwg.mxu0
    %v1125 = vmul.f32 %v870, 0.1
    %v1126 = vmul.f32 %v872, 0.1
    %v1127 = vmul.f32 %v1031, 0.1
    %v1128 = vmul.f32 %v1033, 0.1
    %v1129 = vmul.f32 %v876, 0.1
    %v1130 = vmul.f32 %v878, 0.1
    %v1131 = vmul.f32 %v1037, 0.1
    %v1132 = vmul.f32 %v1039, 0.1
    %v1133 = vmul.f32 %v882, 0.1
    %v1134 = vmul.f32 %v884, 0.1
    %v1135 = vmul.f32 %v1043, 0.1
    %v1136 = vmul.f32 %v1045, 0.1
    %v1137 = vmul.f32 %v888, 0.1
    %v1138 = vmul.f32 %v890, 0.1
    %v1139 = vmul.f32 %v1049, 0.1
    %v1140 = vmul.f32 %v1051, 0.1
    %v1141 = vmul.f32 %v894, 0.1
    %v1142 = vmul.f32 %v896, 0.1
    %v1143 = vmul.f32 %v1055, 0.1
    %v1144 = vmul.f32 %v1057, 0.1
    %v1145 = vmul.f32 %v900, 0.1
    %v1146 = vmul.f32 %v902, 0.1
    %v1147 = vmul.f32 %v1061, 0.1
    %v1148 = vmul.f32 %v1063, 0.1
    %v1149 = vmul.f32 %v906, 0.1
    %v1150 = vmul.f32 %v908, 0.1
    %v1151 = vmul.f32 %v1067, 0.1
    %v1152 = vmul.f32 %v1069, 0.1
    %v1153 = vmul.f32 %v912, 0.1
    %v1154 = vmul.f32 %v914, 0.1
    %v1155 = vmul.f32 %v1073, 0.1
    %v1156 = vmul.f32 %v1075, 0.1
    %v1157 = vmul.f32 %v918, 0.1
    %v1158 = vmul.f32 %v920, 0.1
    %v1159 = vmul.f32 %v1079, 0.1
    %v1160 = vmul.f32 %v1081, 0.1
    %v1161 = vmul.f32 %v924, 0.1
    %v1162 = vmul.f32 %v926, 0.1
    %v1163 = vmul.f32 %v1085, 0.1
    %v1164 = vmul.f32 %v1087, 0.1
    %v1165 = vmul.f32 %v930, 0.1
    %v1166 = vmul.f32 %v932, 0.1
    %v1167 = vmul.f32 %v1091, 0.1
    %v1168 = vmul.f32 %v1093, 0.1
    %v1169 = vmul.f32 %v936, 0.1
    %v1170 = vmul.f32 %v938, 0.1
    %v1171 = vmul.f32 %v1097, 0.1
    %v1172 = vmul.f32 %v1099, 0.1
    %v1173 = vmul.f32 %v942, 0.1
    %v1174 = vmul.f32 %v944, 0.1
    %v1175 = vmul.f32 %v1103, 0.1
    %v1176 = vmul.f32 %v1105, 0.1
    %v1177 = vmul.f32 %v948, 0.1
    %v1178 = vmul.f32 %v950, 0.1
    %v1179 = vmul.f32 %v1109, 0.1
    %v1180 = vmul.f32 %v1111, 0.1
    %v1181 = vmul.f32 %v954, 0.1
    %v1182 = vmul.f32 %v956, 0.1
    %v1183 = vmul.f32 %v1115, 0.1
    %v1184 = vmul.f32 %v1117, 0.1
    %v1185 = vmul.f32 %v960, 0.1
    %v1186 = vmul.f32 %v962, 0.1
    %v1187 = vmul.f32 %v1121, 0.1
    %v1188 = vmul.f32 %v1123, 0.1
    %v1189 = vmax.f32 %v870, %v1125
    %v1190 = vmax.f32 %v872, %v1126
    %v1191 = vmax.f32 %v1031, %v1127
    %v1192 = vmax.f32 %v1033, %v1128
    %v1193 = vmax.f32 %v876, %v1129
    %v1194 = vmax.f32 %v878, %v1130
    %v1195 = vmax.f32 %v1037, %v1131
    %v1196 = vmax.f32 %v1039, %v1132
    %v1197 = vmax.f32 %v882, %v1133
    %v1198 = vmax.f32 %v884, %v1134
    %v1199 = vmax.f32 %v1043, %v1135
    %v1200 = vmax.f32 %v1045, %v1136
    %v1201 = vmax.f32 %v888, %v1137
    %v1202 = vmax.f32 %v890, %v1138
    %v1203 = vmax.f32 %v1049, %v1139
    %v1204 = vmax.f32 %v1051, %v1140
    %v1205 = vmax.f32 %v894, %v1141
    %v1206 = vmax.f32 %v896, %v1142
    %v1207 = vmax.f32 %v1055, %v1143
    %v1208 = vmax.f32 %v1057, %v1144
    %v1209 = vmax.f32 %v900, %v1145
    %v1210 = vmax.f32 %v902, %v1146
    %v1211 = vmax.f32 %v1061, %v1147
    %v1212 = vmax.f32 %v1063, %v1148
    %v1213 = vmax.f32 %v906, %v1149
    %v1214 = vmax.f32 %v908, %v1150
    %v1215 = vmax.f32 %v1067, %v1151
    %v1216 = vmax.f32 %v1069, %v1152
    %v1217 = vmax.f32 %v912, %v1153
    %v1218 = vmax.f32 %v914, %v1154
    %v1219 = vmax.f32 %v1073, %v1155
    %v1220 = vmax.f32 %v1075, %v1156
    %v1221 = vmax.f32 %v918, %v1157
    %v1222 = vmax.f32 %v920, %v1158
    %v1223 = vmax.f32 %v1079, %v1159
    %v1224 = vmax.f32 %v1081, %v1160
    %v1225 = vmax.f32 %v924, %v1161
    %v1226 = vmax.f32 %v926, %v1162
    %v1227 = vmax.f32 %v1085, %v1163
    %v1228 = vmax.f32 %v1087, %v1164
    %v1229 = vmax.f32 %v930, %v1165
    %v1230 = vmax.f32 %v932, %v1166
    %v1231 = vmax.f32 %v1091, %v1167
    %v1232 = vmax.f32 %v1093, %v1168
    %v1233 = vmax.f32 %v936, %v1169
    %v1234 = vmax.f32 %v938, %v1170
    %v1235 = vmax.f32 %v1097, %v1171
    %v1236 = vmax.f32 %v1099, %v1172
    %v1237 = vmax.f32 %v942, %v1173
    %v1238 = vmax.f32 %v944, %v1174
    %v1239 = vmax.f32 %v1103, %v1175
    %v1240 = vmax.f32 %v1105, %v1176
    %v1241 = vmax.f32 %v948, %v1177
    %v1242 = vmax.f32 %v950, %v1178
    %v1243 = vmax.f32 %v1109, %v1179
    %v1244 = vmax.f32 %v1111, %v1180
    %v1245 = vmax.f32 %v954, %v1181
    %v1246 = vmax.f32 %v956, %v1182
    %v1247 = vmax.f32 %v1115, %v1183
    %v1248 = vmax.f32 %v1117, %v1184
    %v1249 = vmax.f32 %v960, %v1185
    %v1250 = vmax.f32 %v962, %v1186
    %v1251 = vmax.f32 %v1121, %v1187
    %v1252 = vmax.f32 %v1123, %v1188
    %s1253 = scalar_lea.vmem %s3, 128
    %v1254 = vld [vmem:[%s1253] sm:$0xff]
    %v1255 = vld [vmem:[%s1253 + $0x8] sm:$0xff]
    %v1256 = vld [vmem:[%s1253 + $0x10] sm:$0xff]
    %v1257 = vld [vmem:[%s1253 + $0x18] sm:$0xff]
    %v1258 = vld [vmem:[%s1253 + $0x20] sm:$0xff]
    %v1259 = vld [vmem:[%s1253 + $0x28] sm:$0xff]
    %v1260 = vld [vmem:[%s1253 + $0x30] sm:$0xff]
    %v1261 = vld [vmem:[%s1253 + $0x38] sm:$0xff]
    %v1262 = vld [vmem:[%s1253 + $0x40] sm:$0xff]
    %v1263 = vld [vmem:[%s1253 + $0x48] sm:$0xff]
    %v1264 = vld [vmem:[%s1253 + $0x50] sm:$0xff]
    %v1265 = vld [vmem:[%s1253 + $0x58] sm:$0xff]
    %v1266 = vld [vmem:[%s1253 + $0x60] sm:$0xff]
    %v1267 = vld [vmem:[%s1253 + $0x68] sm:$0xff]
    %v1268 = vld [vmem:[%s1253 + $0x70] sm:$0xff]
    %v1269 = vld [vmem:[%s1253 + $0x78] sm:$0xff]
    %1271 = vset.pattern.permute.xlu0 0
    %1272 = vperm.xlu0 %1271, %v92
    %v1273 = vpop.permute.xlu0 %1272
    %1276 = vset.pattern.permute.xlu0 0
    %1277 = vperm.xlu0 %1276, %v93
    %v1278 = vpop.permute.xlu0 %1277
    %1281 = vset.pattern.permute.xlu0 0
    %1282 = vperm.xlu0 %1281, %v94
    %v1283 = vpop.permute.xlu0 %1282
    %1286 = vset.pattern.permute.xlu0 0
    %1287 = vperm.xlu0 %1286, %v95
    %v1288 = vpop.permute.xlu0 %1287
    %1291 = vset.pattern.permute.xlu0 0
    %1292 = vperm.xlu0 %1291, %v96
    %v1293 = vpop.permute.xlu0 %1292
    %1296 = vset.pattern.permute.xlu0 0
    %1297 = vperm.xlu0 %1296, %v97
    %v1298 = vpop.permute.xlu0 %1297
    %1301 = vset.pattern.permute.xlu0 0
    %1302 = vperm.xlu0 %1301, %v98
    %v1303 = vpop.permute.xlu0 %1302
    %1306 = vset.pattern.permute.xlu0 0
    %1307 = vperm.xlu0 %1306, %v99
    %v1308 = vpop.permute.xlu0 %1307
    %1311 = vset.pattern.permute.xlu0 0
    %1312 = vperm.xlu0 %1311, %v100
    %v1313 = vpop.permute.xlu0 %1312
    %1316 = vset.pattern.permute.xlu0 0
    %1317 = vperm.xlu0 %1316, %v101
    %v1318 = vpop.permute.xlu0 %1317
    %1321 = vset.pattern.permute.xlu0 0
    %1322 = vperm.xlu0 %1321, %v102
    %v1323 = vpop.permute.xlu0 %1322
    %1326 = vset.pattern.permute.xlu0 0
    %1327 = vperm.xlu0 %1326, %v103
    %v1328 = vpop.permute.xlu0 %1327
    %1331 = vset.pattern.permute.xlu0 0
    %1332 = vperm.xlu0 %1331, %v104
    %v1333 = vpop.permute.xlu0 %1332
    %1336 = vset.pattern.permute.xlu0 0
    %1337 = vperm.xlu0 %1336, %v105
    %v1338 = vpop.permute.xlu0 %1337
    %1341 = vset.pattern.permute.xlu0 0
    %1342 = vperm.xlu0 %1341, %v106
    %v1343 = vpop.permute.xlu0 %1342
    %1346 = vset.pattern.permute.xlu0 0
    %1347 = vperm.xlu0 %1346, %v107
    %v1348 = vpop.permute.xlu0 %1347
    %1350 = vmatprep.subr.mxu0 %v1250
    %1351 = vmatpush1.msra.mxu0 %v1249
    %1352 = vmatprep.subr.mxu0 %v1246
    %1353 = vmatpush1.msra.mxu0 %v1245
    %1354 = vmatprep.subr.mxu0 %v1242
    %1355 = vmatpush1.msra.mxu0 %v1241
    %1356 = vmatprep.subr.mxu0 %v1238
    %1357 = vmatpush1.msra.mxu0 %v1237
    %1358 = vmatprep.subr.mxu0 %v1234
    %1359 = vmatpush1.msra.mxu0 %v1233
    %1360 = vmatprep.subr.mxu0 %v1230
    %1361 = vmatpush1.msra.mxu0 %v1229
    %1362 = vmatprep.subr.mxu0 %v1226
    %1363 = vmatpush1.msra.mxu0 %v1225
    %1364 = vmatprep.subr.mxu0 %v1222
    %1365 = vmatpush1.msra.mxu0 %v1221
    %1366 = vmatprep.subr.mxu0 %v1218
    %1367 = vmatpush1.msra.mxu0 %v1217
    %1368 = vmatprep.subr.mxu0 %v1214
    %1369 = vmatpush1.msra.mxu0 %v1213
    %1370 = vmatprep.subr.mxu0 %v1210
    %1371 = vmatpush1.msra.mxu0 %v1209
    %1372 = vmatprep.subr.mxu0 %v1206
    %1373 = vmatpush1.msra.mxu0 %v1205
    %1374 = vmatprep.subr.mxu0 %v1202
    %1375 = vmatpush1.msra.mxu0 %v1201
    %1376 = vmatprep.subr.mxu0 %v1198
    %1377 = vmatpush1.msra.mxu0 %v1197
    %1378 = vmatprep.subr.mxu0 %v1194
    %1379 = vmatpush1.msra.mxu0 %v1193
    %1380 = vmatprep.subr.mxu0 %v1190
    %1381 = vmatpush1.msra.mxu0 %v1189
    %1382 = vmatprep.subr.mxu0 0.0
    %1383 = vmatpush2.msra.mxu0 0.0
    %1384 = vmatprep.subr.mxu0 0.0
    %1385 = vmatpush2.msra.mxu0 0.0
    %1386 = vmatprep.subr.mxu0 0.0
    %1387 = vmatpush2.msra.mxu0 0.0
    %1388 = vmatprep.subr.mxu0 0.0
    %1389 = vmatpush2.msra.mxu0 0.0
    %1390 = vmatprep.subr.mxu0 0.0
    %1391 = vmatpush2.msra.mxu0 0.0
    %1392 = vmatprep.subr.mxu0 0.0
    %1393 = vmatpush2.msra.mxu0 0.0
    %1394 = vmatprep.subr.mxu0 0.0
    %1395 = vmatpush2.msra.mxu0 0.0
    %1396 = vmatprep.subr.mxu0 0.0
    %1397 = vmatpush2.msra.mxu0 0.0
    %1398 = vmatprep.subr.mxu0 0.0
    %1399 = vmatpush2.msra.mxu0 0.0
    %1400 = vmatprep.subr.mxu0 0.0
    %1401 = vmatpush2.msra.mxu0 0.0
    %1402 = vmatprep.subr.mxu0 0.0
    %1403 = vmatpush2.msra.mxu0 0.0
    %1404 = vmatprep.subr.mxu0 0.0
    %1405 = vmatpush2.msra.mxu0 0.0
    %1406 = vmatprep.subr.mxu0 0.0
    %1407 = vmatpush2.msra.mxu0 0.0
    %1408 = vmatprep.subr.mxu0 0.0
    %1409 = vmatpush2.msra.mxu0 0.0
    %1410 = vmatprep.subr.mxu0 0.0
    %1411 = vmatpush2.msra.mxu0 0.0
    %1412 = vmatprep.subr.mxu0 0.0
    %1413 = vmatpush2.msra.mxu0 0.0
    %1414 = vmatprep.mubr.f32.mxu0 0.0
    %1415 = vmatmul.mubr.f32.gmra.mxu0 %v1254
    %v1416 = vpop.f32.mrf.mxu0
    %v1417 = vadd.f32 %v1273, %v1416
    %v1418 = vpop.f32.mrf.mxu0
    %v1419 = vadd.f32 %v1273, %v1418
    %1420 = vmatprep.mubr.f32.mxu0 0.0
    %1421 = vmatmul.mubr.f32.gmra.mxu0 %v1255
    %v1422 = vpop.f32.mrf.mxu0
    %v1423 = vadd.f32 %v1278, %v1422
    %v1424 = vpop.f32.mrf.mxu0
    %v1425 = vadd.f32 %v1278, %v1424
    %1426 = vmatprep.mubr.f32.mxu0 0.0
    %1427 = vmatmul.mubr.f32.gmra.mxu0 %v1256
    %v1428 = vpop.f32.mrf.mxu0
    %v1429 = vadd.f32 %v1283, %v1428
    %v1430 = vpop.f32.mrf.mxu0
    %v1431 = vadd.f32 %v1283, %v1430
    %1432 = vmatprep.mubr.f32.mxu0 0.0
    %1433 = vmatmul.mubr.f32.gmra.mxu0 %v1257
    %v1434 = vpop.f32.mrf.mxu0
    %v1435 = vadd.f32 %v1288, %v1434
    %v1436 = vpop.f32.mrf.mxu0
    %v1437 = vadd.f32 %v1288, %v1436
    %1438 = vmatprep.mubr.f32.mxu0 0.0
    %1439 = vmatmul.mubr.f32.gmra.mxu0 %v1258
    %v1440 = vpop.f32.mrf.mxu0
    %v1441 = vadd.f32 %v1293, %v1440
    %v1442 = vpop.f32.mrf.mxu0
    %v1443 = vadd.f32 %v1293, %v1442
    %1444 = vmatprep.mubr.f32.mxu0 0.0
    %1445 = vmatmul.mubr.f32.gmra.mxu0 %v1259
    %v1446 = vpop.f32.mrf.mxu0
    %v1447 = vadd.f32 %v1298, %v1446
    %v1448 = vpop.f32.mrf.mxu0
    %v1449 = vadd.f32 %v1298, %v1448
    %1450 = vmatprep.mubr.f32.mxu0 0.0
    %1451 = vmatmul.mubr.f32.gmra.mxu0 %v1260
    %v1452 = vpop.f32.mrf.mxu0
    %v1453 = vadd.f32 %v1303, %v1452
    %v1454 = vpop.f32.mrf.mxu0
    %v1455 = vadd.f32 %v1303, %v1454
    %1456 = vmatprep.mubr.f32.mxu0 0.0
    %1457 = vmatmul.mubr.f32.gmra.mxu0 %v1261
    %v1458 = vpop.f32.mrf.mxu0
    %v1459 = vadd.f32 %v1308, %v1458
    %v1460 = vpop.f32.mrf.mxu0
    %v1461 = vadd.f32 %v1308, %v1460
    %1462 = vmatprep.mubr.f32.mxu0 0.0
    %1463 = vmatmul.mubr.f32.gmra.mxu0 %v1262
    %v1464 = vpop.f32.mrf.mxu0
    %v1465 = vadd.f32 %v1313, %v1464
    %v1466 = vpop.f32.mrf.mxu0
    %v1467 = vadd.f32 %v1313, %v1466
    %1468 = vmatprep.mubr.f32.mxu0 0.0
    %1469 = vmatmul.mubr.f32.gmra.mxu0 %v1263
    %v1470 = vpop.f32.mrf.mxu0
    %v1471 = vadd.f32 %v1318, %v1470
    %v1472 = vpop.f32.mrf.mxu0
    %v1473 = vadd.f32 %v1318, %v1472
    %1474 = vmatprep.mubr.f32.mxu0 0.0
    %1475 = vmatmul.mubr.f32.gmra.mxu0 %v1264
    %v1476 = vpop.f32.mrf.mxu0
    %v1477 = vadd.f32 %v1323, %v1476
    %v1478 = vpop.f32.mrf.mxu0
    %v1479 = vadd.f32 %v1323, %v1478
    %1480 = vmatprep.mubr.f32.mxu0 0.0
    %1481 = vmatmul.mubr.f32.gmra.mxu0 %v1265
    %v1482 = vpop.f32.mrf.mxu0
    %v1483 = vadd.f32 %v1328, %v1482
    %v1484 = vpop.f32.mrf.mxu0
    %v1485 = vadd.f32 %v1328, %v1484
    %1486 = vmatprep.mubr.f32.mxu0 0.0
    %1487 = vmatmul.mubr.f32.gmra.mxu0 %v1266
    %v1488 = vpop.f32.mrf.mxu0
    %v1489 = vadd.f32 %v1333, %v1488
    %v1490 = vpop.f32.mrf.mxu0
    %v1491 = vadd.f32 %v1333, %v1490
    %1492 = vmatprep.mubr.f32.mxu0 0.0
    %1493 = vmatmul.mubr.f32.gmra.mxu0 %v1267
    %v1494 = vpop.f32.mrf.mxu0
    %v1495 = vadd.f32 %v1338, %v1494
    %v1496 = vpop.f32.mrf.mxu0
    %v1497 = vadd.f32 %v1338, %v1496
    %1498 = vmatprep.mubr.f32.mxu0 0.0
    %1499 = vmatmul.mubr.f32.gmra.mxu0 %v1268
    %v1500 = vpop.f32.mrf.mxu0
    %v1501 = vadd.f32 %v1343, %v1500
    %v1502 = vpop.f32.mrf.mxu0
    %v1503 = vadd.f32 %v1343, %v1502
    %1504 = vmatprep.mubr.f32.mxu0 0.0
    %1505 = vmatmul.mubr.f32.gmra.mxu0 %v1269
    %v1506 = vpop.f32.mrf.mxu0
    %v1507 = vadd.f32 %v1348, %v1506
    %v1508 = vpop.f32.mrf.mxu0
    %v1509 = vadd.f32 %v1348, %v1508
    %1510 = vdwg.mxu0
    %1511 = vmatprep.subr.mxu0 %v1252
    %1512 = vmatpush1.msra.mxu0 %v1251
    %1513 = vmatprep.subr.mxu0 %v1248
    %1514 = vmatpush1.msra.mxu0 %v1247
    %1515 = vmatprep.subr.mxu0 %v1244
    %1516 = vmatpush1.msra.mxu0 %v1243
    %1517 = vmatprep.subr.mxu0 %v1240
    %1518 = vmatpush1.msra.mxu0 %v1239
    %1519 = vmatprep.subr.mxu0 %v1236
    %1520 = vmatpush1.msra.mxu0 %v1235
    %1521 = vmatprep.subr.mxu0 %v1232
    %1522 = vmatpush1.msra.mxu0 %v1231
    %1523 = vmatprep.subr.mxu0 %v1228
    %1524 = vmatpush1.msra.mxu0 %v1227
    %1525 = vmatprep.subr.mxu0 %v1224
    %1526 = vmatpush1.msra.mxu0 %v1223
    %1527 = vmatprep.subr.mxu0 %v1220
    %1528 = vmatpush1.msra.mxu0 %v1219
    %1529 = vmatprep.subr.mxu0 %v1216
    %1530 = vmatpush1.msra.mxu0 %v1215
    %1531 = vmatprep.subr.mxu0 %v1212
    %1532 = vmatpush1.msra.mxu0 %v1211
    %1533 = vmatprep.subr.mxu0 %v1208
    %1534 = vmatpush1.msra.mxu0 %v1207
    %1535 = vmatprep.subr.mxu0 %v1204
    %1536 = vmatpush1.msra.mxu0 %v1203
    %1537 = vmatprep.subr.mxu0 %v1200
    %1538 = vmatpush1.msra.mxu0 %v1199
    %1539 = vmatprep.subr.mxu0 %v1196
    %1540 = vmatpush1.msra.mxu0 %v1195
    %1541 = vmatprep.subr.mxu0 %v1192
    %1542 = vmatpush1.msra.mxu0 %v1191
    %1543 = vmatprep.subr.mxu0 0.0
    %1544 = vmatpush2.msra.mxu0 0.0
    %1545 = vmatprep.subr.mxu0 0.0
    %1546 = vmatpush2.msra.mxu0 0.0
    %1547 = vmatprep.subr.mxu0 0.0
    %1548 = vmatpush2.msra.mxu0 0.0
    %1549 = vmatprep.subr.mxu0 0.0
    %1550 = vmatpush2.msra.mxu0 0.0
    %1551 = vmatprep.subr.mxu0 0.0
    %1552 = vmatpush2.msra.mxu0 0.0
    %1553 = vmatprep.subr.mxu0 0.0
    %1554 = vmatpush2.msra.mxu0 0.0
    %1555 = vmatprep.subr.mxu0 0.0
    %1556 = vmatpush2.msra.mxu0 0.0
    %1557 = vmatprep.subr.mxu0 0.0
    %1558 = vmatpush2.msra.mxu0 0.0
    %1559 = vmatprep.subr.mxu0 0.0
    %1560 = vmatpush2.msra.mxu0 0.0
    %1561 = vmatprep.subr.mxu0 0.0
    %1562 = vmatpush2.msra.mxu0 0.0
    %1563 = vmatprep.subr.mxu0 0.0
    %1564 = vmatpush2.msra.mxu0 0.0
    %1565 = vmatprep.subr.mxu0 0.0
    %1566 = vmatpush2.msra.mxu0 0.0
    %1567 = vmatprep.subr.mxu0 0.0
    %1568 = vmatpush2.msra.mxu0 0.0
    %1569 = vmatprep.subr.mxu0 0.0
    %1570 = vmatpush2.msra.mxu0 0.0
    %1571 = vmatprep.subr.mxu0 0.0
    %1572 = vmatpush2.msra.mxu0 0.0
    %1573 = vmatprep.subr.mxu0 0.0
    %1574 = vmatpush2.msra.mxu0 0.0
    %1575 = vmatprep.mubr.f32.mxu0 0.0
    %1576 = vmatmul.mubr.f32.gmra.mxu0 %v1254
    %v1577 = vpop.f32.mrf.mxu0
    %v1578 = vadd.f32 %v1273, %v1577
    %v1579 = vpop.f32.mrf.mxu0
    %v1580 = vadd.f32 %v1273, %v1579
    %1581 = vmatprep.mubr.f32.mxu0 0.0
    %1582 = vmatmul.mubr.f32.gmra.mxu0 %v1255
    %v1583 = vpop.f32.mrf.mxu0
    %v1584 = vadd.f32 %v1278, %v1583
    %v1585 = vpop.f32.mrf.mxu0
    %v1586 = vadd.f32 %v1278, %v1585
    %1587 = vmatprep.mubr.f32.mxu0 0.0
    %1588 = vmatmul.mubr.f32.gmra.mxu0 %v1256
    %v1589 = vpop.f32.mrf.mxu0
    %v1590 = vadd.f32 %v1283, %v1589
    %v1591 = vpop.f32.mrf.mxu0
    %v1592 = vadd.f32 %v1283, %v1591
    %1593 = vmatprep.mubr.f32.mxu0 0.0
    %1594 = vmatmul.mubr.f32.gmra.mxu0 %v1257
    %v1595 = vpop.f32.mrf.mxu0
    %v1596 = vadd.f32 %v1288, %v1595
    %v1597 = vpop.f32.mrf.mxu0
    %v1598 = vadd.f32 %v1288, %v1597
    %1599 = vmatprep.mubr.f32.mxu0 0.0
    %1600 = vmatmul.mubr.f32.gmra.mxu0 %v1258
    %v1601 = vpop.f32.mrf.mxu0
    %v1602 = vadd.f32 %v1293, %v1601
    %v1603 = vpop.f32.mrf.mxu0
    %v1604 = vadd.f32 %v1293, %v1603
    %1605 = vmatprep.mubr.f32.mxu0 0.0
    %1606 = vmatmul.mubr.f32.gmra.mxu0 %v1259
    %v1607 = vpop.f32.mrf.mxu0
    %v1608 = vadd.f32 %v1298, %v1607
    %v1609 = vpop.f32.mrf.mxu0
    %v1610 = vadd.f32 %v1298, %v1609
    %1611 = vmatprep.mubr.f32.mxu0 0.0
    %1612 = vmatmul.mubr.f32.gmra.mxu0 %v1260
    %v1613 = vpop.f32.mrf.mxu0
    %v1614 = vadd.f32 %v1303, %v1613
    %v1615 = vpop.f32.mrf.mxu0
    %v1616 = vadd.f32 %v1303, %v1615
    %1617 = vmatprep.mubr.f32.mxu0 0.0
    %1618 = vmatmul.mubr.f32.gmra.mxu0 %v1261
    %v1619 = vpop.f32.mrf.mxu0
    %v1620 = vadd.f32 %v1308, %v1619
    %v1621 = vpop.f32.mrf.mxu0
    %v1622 = vadd.f32 %v1308, %v1621
    %1623 = vmatprep.mubr.f32.mxu0 0.0
    %1624 = vmatmul.mubr.f32.gmra.mxu0 %v1262
    %v1625 = vpop.f32.mrf.mxu0
    %v1626 = vadd.f32 %v1313, %v1625
    %v1627 = vpop.f32.mrf.mxu0
    %v1628 = vadd.f32 %v1313, %v1627
    %1629 = vmatprep.mubr.f32.mxu0 0.0
    %1630 = vmatmul.mubr.f32.gmra.mxu0 %v1263
    %v1631 = vpop.f32.mrf.mxu0
    %v1632 = vadd.f32 %v1318, %v1631
    %v1633 = vpop.f32.mrf.mxu0
    %v1634 = vadd.f32 %v1318, %v1633
    %1635 = vmatprep.mubr.f32.mxu0 0.0
    %1636 = vmatmul.mubr.f32.gmra.mxu0 %v1264
    %v1637 = vpop.f32.mrf.mxu0
    %v1638 = vadd.f32 %v1323, %v1637
    %v1639 = vpop.f32.mrf.mxu0
    %v1640 = vadd.f32 %v1323, %v1639
    %1641 = vmatprep.mubr.f32.mxu0 0.0
    %1642 = vmatmul.mubr.f32.gmra.mxu0 %v1265
    %v1643 = vpop.f32.mrf.mxu0
    %v1644 = vadd.f32 %v1328, %v1643
    %v1645 = vpop.f32.mrf.mxu0
    %v1646 = vadd.f32 %v1328, %v1645
    %1647 = vmatprep.mubr.f32.mxu0 0.0
    %1648 = vmatmul.mubr.f32.gmra.mxu0 %v1266
    %v1649 = vpop.f32.mrf.mxu0
    %v1650 = vadd.f32 %v1333, %v1649
    %v1651 = vpop.f32.mrf.mxu0
    %v1652 = vadd.f32 %v1333, %v1651
    %1653 = vmatprep.mubr.f32.mxu0 0.0
    %1654 = vmatmul.mubr.f32.gmra.mxu0 %v1267
    %v1655 = vpop.f32.mrf.mxu0
    %v1656 = vadd.f32 %v1338, %v1655
    %v1657 = vpop.f32.mrf.mxu0
    %v1658 = vadd.f32 %v1338, %v1657
    %1659 = vmatprep.mubr.f32.mxu0 0.0
    %1660 = vmatmul.mubr.f32.gmra.mxu0 %v1268
    %v1661 = vpop.f32.mrf.mxu0
    %v1662 = vadd.f32 %v1343, %v1661
    %v1663 = vpop.f32.mrf.mxu0
    %v1664 = vadd.f32 %v1343, %v1663
    %1665 = vmatprep.mubr.f32.mxu0 0.0
    %1666 = vmatmul.mubr.f32.gmra.mxu0 %v1269
    %v1667 = vpop.f32.mrf.mxu0
    %v1668 = vadd.f32 %v1348, %v1667
    %v1669 = vpop.f32.mrf.mxu0
    %v1670 = vadd.f32 %v1348, %v1669
    %1671 = vdwg.mxu0
    %v1672 = vmul.f32 %v1417, 0.1
    %v1673 = vmul.f32 %v1419, 0.1
    %v1674 = vmul.f32 %v1578, 0.1
    %v1675 = vmul.f32 %v1580, 0.1
    %v1676 = vmul.f32 %v1423, 0.1
    %v1677 = vmul.f32 %v1425, 0.1
    %v1678 = vmul.f32 %v1584, 0.1
    %v1679 = vmul.f32 %v1586, 0.1
    %v1680 = vmul.f32 %v1429, 0.1
    %v1681 = vmul.f32 %v1431, 0.1
    %v1682 = vmul.f32 %v1590, 0.1
    %v1683 = vmul.f32 %v1592, 0.1
    %v1684 = vmul.f32 %v1435, 0.1
    %v1685 = vmul.f32 %v1437, 0.1
    %v1686 = vmul.f32 %v1596, 0.1
    %v1687 = vmul.f32 %v1598, 0.1
    %v1688 = vmul.f32 %v1441, 0.1
    %v1689 = vmul.f32 %v1443, 0.1
    %v1690 = vmul.f32 %v1602, 0.1
    %v1691 = vmul.f32 %v1604, 0.1
    %v1692 = vmul.f32 %v1447, 0.1
    %v1693 = vmul.f32 %v1449, 0.1
    %v1694 = vmul.f32 %v1608, 0.1
    %v1695 = vmul.f32 %v1610, 0.1
    %v1696 = vmul.f32 %v1453, 0.1
    %v1697 = vmul.f32 %v1455, 0.1
    %v1698 = vmul.f32 %v1614, 0.1
    %v1699 = vmul.f32 %v1616, 0.1
    %v1700 = vmul.f32 %v1459, 0.1
    %v1701 = vmul.f32 %v1461, 0.1
    %v1702 = vmul.f32 %v1620, 0.1
    %v1703 = vmul.f32 %v1622, 0.1
    %v1704 = vmul.f32 %v1465, 0.1
    %v1705 = vmul.f32 %v1467, 0.1
    %v1706 = vmul.f32 %v1626, 0.1
    %v1707 = vmul.f32 %v1628, 0.1
    %v1708 = vmul.f32 %v1471, 0.1
    %v1709 = vmul.f32 %v1473, 0.1
    %v1710 = vmul.f32 %v1632, 0.1
    %v1711 = vmul.f32 %v1634, 0.1
    %v1712 = vmul.f32 %v1477, 0.1
    %v1713 = vmul.f32 %v1479, 0.1
    %v1714 = vmul.f32 %v1638, 0.1
    %v1715 = vmul.f32 %v1640, 0.1
    %v1716 = vmul.f32 %v1483, 0.1
    %v1717 = vmul.f32 %v1485, 0.1
    %v1718 = vmul.f32 %v1644, 0.1
    %v1719 = vmul.f32 %v1646, 0.1
    %v1720 = vmul.f32 %v1489, 0.1
    %v1721 = vmul.f32 %v1491, 0.1
    %v1722 = vmul.f32 %v1650, 0.1
    %v1723 = vmul.f32 %v1652, 0.1
    %v1724 = vmul.f32 %v1495, 0.1
    %v1725 = vmul.f32 %v1497, 0.1
    %v1726 = vmul.f32 %v1656, 0.1
    %v1727 = vmul.f32 %v1658, 0.1
    %v1728 = vmul.f32 %v1501, 0.1
    %v1729 = vmul.f32 %v1503, 0.1
    %v1730 = vmul.f32 %v1662, 0.1
    %v1731 = vmul.f32 %v1664, 0.1
    %v1732 = vmul.f32 %v1507, 0.1
    %v1733 = vmul.f32 %v1509, 0.1
    %v1734 = vmul.f32 %v1668, 0.1
    %v1735 = vmul.f32 %v1670, 0.1
    %v1736 = vmax.f32 %v1417, %v1672
    %v1737 = vmax.f32 %v1419, %v1673
    %v1738 = vmax.f32 %v1578, %v1674
    %v1739 = vmax.f32 %v1580, %v1675
    %v1740 = vmax.f32 %v1423, %v1676
    %v1741 = vmax.f32 %v1425, %v1677
    %v1742 = vmax.f32 %v1584, %v1678
    %v1743 = vmax.f32 %v1586, %v1679
    %v1744 = vmax.f32 %v1429, %v1680
    %v1745 = vmax.f32 %v1431, %v1681
    %v1746 = vmax.f32 %v1590, %v1682
    %v1747 = vmax.f32 %v1592, %v1683
    %v1748 = vmax.f32 %v1435, %v1684
    %v1749 = vmax.f32 %v1437, %v1685
    %v1750 = vmax.f32 %v1596, %v1686
    %v1751 = vmax.f32 %v1598, %v1687
    %v1752 = vmax.f32 %v1441, %v1688
    %v1753 = vmax.f32 %v1443, %v1689
    %v1754 = vmax.f32 %v1602, %v1690
    %v1755 = vmax.f32 %v1604, %v1691
    %v1756 = vmax.f32 %v1447, %v1692
    %v1757 = vmax.f32 %v1449, %v1693
    %v1758 = vmax.f32 %v1608, %v1694
    %v1759 = vmax.f32 %v1610, %v1695
    %v1760 = vmax.f32 %v1453, %v1696
    %v1761 = vmax.f32 %v1455, %v1697
    %v1762 = vmax.f32 %v1614, %v1698
    %v1763 = vmax.f32 %v1616, %v1699
    %v1764 = vmax.f32 %v1459, %v1700
    %v1765 = vmax.f32 %v1461, %v1701
    %v1766 = vmax.f32 %v1620, %v1702
    %v1767 = vmax.f32 %v1622, %v1703
    %v1768 = vmax.f32 %v1465, %v1704
    %v1769 = vmax.f32 %v1467, %v1705
    %v1770 = vmax.f32 %v1626, %v1706
    %v1771 = vmax.f32 %v1628, %v1707
    %v1772 = vmax.f32 %v1471, %v1708
    %v1773 = vmax.f32 %v1473, %v1709
    %v1774 = vmax.f32 %v1632, %v1710
    %v1775 = vmax.f32 %v1634, %v1711
    %v1776 = vmax.f32 %v1477, %v1712
    %v1777 = vmax.f32 %v1479, %v1713
    %v1778 = vmax.f32 %v1638, %v1714
    %v1779 = vmax.f32 %v1640, %v1715
    %v1780 = vmax.f32 %v1483, %v1716
    %v1781 = vmax.f32 %v1485, %v1717
    %v1782 = vmax.f32 %v1644, %v1718
    %v1783 = vmax.f32 %v1646, %v1719
    %v1784 = vmax.f32 %v1489, %v1720
    %v1785 = vmax.f32 %v1491, %v1721
    %v1786 = vmax.f32 %v1650, %v1722
    %v1787 = vmax.f32 %v1652, %v1723
    %v1788 = vmax.f32 %v1495, %v1724
    %v1789 = vmax.f32 %v1497, %v1725
    %v1790 = vmax.f32 %v1656, %v1726
    %v1791 = vmax.f32 %v1658, %v1727
    %v1792 = vmax.f32 %v1501, %v1728
    %v1793 = vmax.f32 %v1503, %v1729
    %v1794 = vmax.f32 %v1662, %v1730
    %v1795 = vmax.f32 %v1664, %v1731
    %v1796 = vmax.f32 %v1507, %v1732
    %v1797 = vmax.f32 %v1509, %v1733
    %v1798 = vmax.f32 %v1668, %v1734
    %v1799 = vmax.f32 %v1670, %v1735
    %v1800 = vld [vmem:[%s4] sm:$0xff]
    %v1801 = vld [vmem:[%s4 + $0x8] sm:$0xff]
    %v1802 = vld [vmem:[%s4 + $0x10] sm:$0xff]
    %v1803 = vld [vmem:[%s4 + $0x18] sm:$0xff]
    %1805 = vset.pattern.permute.xlu0 0
    %1806 = vperm.xlu0 %1805, %v108
    %v1807 = vpop.permute.xlu0 %1806
    %1810 = vset.pattern.permute.xlu0 0
    %1811 = vperm.xlu0 %1810, %v109
    %v1812 = vpop.permute.xlu0 %1811
    %1815 = vset.pattern.permute.xlu0 0
    %1816 = vperm.xlu0 %1815, %v110
    %v1817 = vpop.permute.xlu0 %1816
    %1820 = vset.pattern.permute.xlu0 0
    %1821 = vperm.xlu0 %1820, %v111
    %v1822 = vpop.permute.xlu0 %1821
    %1824 = vmatprep.subr.mxu0 %v1797
    %1825 = vmatpush1.msra.mxu0 %v1796
    %1826 = vmatprep.subr.mxu0 %v1793
    %1827 = vmatpush1.msra.mxu0 %v1792
    %1828 = vmatprep.subr.mxu0 %v1789
    %1829 = vmatpush1.msra.mxu0 %v1788
    %1830 = vmatprep.subr.mxu0 %v1785
    %1831 = vmatpush1.msra.mxu0 %v1784
    %1832 = vmatprep.subr.mxu0 %v1781
    %1833 = vmatpush1.msra.mxu0 %v1780
    %1834 = vmatprep.subr.mxu0 %v1777
    %1835 = vmatpush1.msra.mxu0 %v1776
    %1836 = vmatprep.subr.mxu0 %v1773
    %1837 = vmatpush1.msra.mxu0 %v1772
    %1838 = vmatprep.subr.mxu0 %v1769
    %1839 = vmatpush1.msra.mxu0 %v1768
    %1840 = vmatprep.subr.mxu0 %v1765
    %1841 = vmatpush1.msra.mxu0 %v1764
    %1842 = vmatprep.subr.mxu0 %v1761
    %1843 = vmatpush1.msra.mxu0 %v1760
    %1844 = vmatprep.subr.mxu0 %v1757
    %1845 = vmatpush1.msra.mxu0 %v1756
    %1846 = vmatprep.subr.mxu0 %v1753
    %1847 = vmatpush1.msra.mxu0 %v1752
    %1848 = vmatprep.subr.mxu0 %v1749
    %1849 = vmatpush1.msra.mxu0 %v1748
    %1850 = vmatprep.subr.mxu0 %v1745
    %1851 = vmatpush1.msra.mxu0 %v1744
    %1852 = vmatprep.subr.mxu0 %v1741
    %1853 = vmatpush1.msra.mxu0 %v1740
    %1854 = vmatprep.subr.mxu0 %v1737
    %1855 = vmatpush1.msra.mxu0 %v1736
    %1856 = vmatprep.subr.mxu0 0.0
    %1857 = vmatpush2.msra.mxu0 0.0
    %1858 = vmatprep.subr.mxu0 0.0
    %1859 = vmatpush2.msra.mxu0 0.0
    %1860 = vmatprep.subr.mxu0 0.0
    %1861 = vmatpush2.msra.mxu0 0.0
    %1862 = vmatprep.subr.mxu0 0.0
    %1863 = vmatpush2.msra.mxu0 0.0
    %1864 = vmatprep.subr.mxu0 0.0
    %1865 = vmatpush2.msra.mxu0 0.0
    %1866 = vmatprep.subr.mxu0 0.0
    %1867 = vmatpush2.msra.mxu0 0.0
    %1868 = vmatprep.subr.mxu0 0.0
    %1869 = vmatpush2.msra.mxu0 0.0
    %1870 = vmatprep.subr.mxu0 0.0
    %1871 = vmatpush2.msra.mxu0 0.0
    %1872 = vmatprep.subr.mxu0 0.0
    %1873 = vmatpush2.msra.mxu0 0.0
    %1874 = vmatprep.subr.mxu0 0.0
    %1875 = vmatpush2.msra.mxu0 0.0
    %1876 = vmatprep.subr.mxu0 0.0
    %1877 = vmatpush2.msra.mxu0 0.0
    %1878 = vmatprep.subr.mxu0 0.0
    %1879 = vmatpush2.msra.mxu0 0.0
    %1880 = vmatprep.subr.mxu0 0.0
    %1881 = vmatpush2.msra.mxu0 0.0
    %1882 = vmatprep.subr.mxu0 0.0
    %1883 = vmatpush2.msra.mxu0 0.0
    %1884 = vmatprep.subr.mxu0 0.0
    %1885 = vmatpush2.msra.mxu0 0.0
    %1886 = vmatprep.subr.mxu0 0.0
    %1887 = vmatpush2.msra.mxu0 0.0
    %1888 = vmatprep.mubr.f32.mxu0 0.0
    %1889 = vmatmul.mubr.f32.gmra.mxu0 %v1800
    %v1890 = vpop.f32.mrf.mxu0
    %v1891 = vadd.f32 %v1807, %v1890
    %v1892 = vpop.f32.mrf.mxu0
    %v1893 = vadd.f32 %v1807, %v1892
    %1894 = vmatprep.mubr.f32.mxu0 0.0
    %1895 = vmatmul.mubr.f32.gmra.mxu0 %v1801
    %v1896 = vpop.f32.mrf.mxu0
    %v1897 = vadd.f32 %v1812, %v1896
    %v1898 = vpop.f32.mrf.mxu0
    %v1899 = vadd.f32 %v1812, %v1898
    %1900 = vmatprep.mubr.f32.mxu0 0.0
    %1901 = vmatmul.mubr.f32.gmra.mxu0 %v1802
    %v1902 = vpop.f32.mrf.mxu0
    %v1903 = vadd.f32 %v1817, %v1902
    %v1904 = vpop.f32.mrf.mxu0
    %v1905 = vadd.f32 %v1817, %v1904
    %1906 = vmatprep.mubr.f32.mxu0 0.0
    %1907 = vmatmul.mubr.f32.gmra.mxu0 %v1803
    %v1908 = vpop.f32.mrf.mxu0
    %v1909 = vadd.f32 %v1822, %v1908
    %v1910 = vpop.f32.mrf.mxu0
    %v1911 = vadd.f32 %v1822, %v1910
    %1912 = vdwg.mxu0
    %1913 = vmatprep.subr.mxu0 %v1799
    %1914 = vmatpush1.msra.mxu0 %v1798
    %1915 = vmatprep.subr.mxu0 %v1795
    %1916 = vmatpush1.msra.mxu0 %v1794
    %1917 = vmatprep.subr.mxu0 %v1791
    %1918 = vmatpush1.msra.mxu0 %v1790
    %1919 = vmatprep.subr.mxu0 %v1787
    %1920 = vmatpush1.msra.mxu0 %v1786
    %1921 = vmatprep.subr.mxu0 %v1783
    %1922 = vmatpush1.msra.mxu0 %v1782
    %1923 = vmatprep.subr.mxu0 %v1779
    %1924 = vmatpush1.msra.mxu0 %v1778
    %1925 = vmatprep.subr.mxu0 %v1775
    %1926 = vmatpush1.msra.mxu0 %v1774
    %1927 = vmatprep.subr.mxu0 %v1771
    %1928 = vmatpush1.msra.mxu0 %v1770
    %1929 = vmatprep.subr.mxu0 %v1767
    %1930 = vmatpush1.msra.mxu0 %v1766
    %1931 = vmatprep.subr.mxu0 %v1763
    %1932 = vmatpush1.msra.mxu0 %v1762
    %1933 = vmatprep.subr.mxu0 %v1759
    %1934 = vmatpush1.msra.mxu0 %v1758
    %1935 = vmatprep.subr.mxu0 %v1755
    %1936 = vmatpush1.msra.mxu0 %v1754
    %1937 = vmatprep.subr.mxu0 %v1751
    %1938 = vmatpush1.msra.mxu0 %v1750
    %1939 = vmatprep.subr.mxu0 %v1747
    %1940 = vmatpush1.msra.mxu0 %v1746
    %1941 = vmatprep.subr.mxu0 %v1743
    %1942 = vmatpush1.msra.mxu0 %v1742
    %1943 = vmatprep.subr.mxu0 %v1739
    %1944 = vmatpush1.msra.mxu0 %v1738
    %1945 = vmatprep.subr.mxu0 0.0
    %1946 = vmatpush2.msra.mxu0 0.0
    %1947 = vmatprep.subr.mxu0 0.0
    %1948 = vmatpush2.msra.mxu0 0.0
    %1949 = vmatprep.subr.mxu0 0.0
    %1950 = vmatpush2.msra.mxu0 0.0
    %1951 = vmatprep.subr.mxu0 0.0
    %1952 = vmatpush2.msra.mxu0 0.0
    %1953 = vmatprep.subr.mxu0 0.0
    %1954 = vmatpush2.msra.mxu0 0.0
    %1955 = vmatprep.subr.mxu0 0.0
    %1956 = vmatpush2.msra.mxu0 0.0
    %1957 = vmatprep.subr.mxu0 0.0
    %1958 = vmatpush2.msra.mxu0 0.0
    %1959 = vmatprep.subr.mxu0 0.0
    %1960 = vmatpush2.msra.mxu0 0.0
    %1961 = vmatprep.subr.mxu0 0.0
    %1962 = vmatpush2.msra.mxu0 0.0
    %1963 = vmatprep.subr.mxu0 0.0
    %1964 = vmatpush2.msra.mxu0 0.0
    %1965 = vmatprep.subr.mxu0 0.0
    %1966 = vmatpush2.msra.mxu0 0.0
    %1967 = vmatprep.subr.mxu0 0.0
    %1968 = vmatpush2.msra.mxu0 0.0
    %1969 = vmatprep.subr.mxu0 0.0
    %1970 = vmatpush2.msra.mxu0 0.0
    %1971 = vmatprep.subr.mxu0 0.0
    %1972 = vmatpush2.msra.mxu0 0.0
    %1973 = vmatprep.subr.mxu0 0.0
    %1974 = vmatpush2.msra.mxu0 0.0
    %1975 = vmatprep.subr.mxu0 0.0
    %1976 = vmatpush2.msra.mxu0 0.0
    %1977 = vmatprep.mubr.f32.mxu0 0.0
    %1978 = vmatmul.mubr.f32.gmra.mxu0 %v1800
    %v1979 = vpop.f32.mrf.mxu0
    %v1980 = vadd.f32 %v1807, %v1979
    %v1981 = vpop.f32.mrf.mxu0
    %v1982 = vadd.f32 %v1807, %v1981
    %1983 = vmatprep.mubr.f32.mxu0 0.0
    %1984 = vmatmul.mubr.f32.gmra.mxu0 %v1801
    %v1985 = vpop.f32.mrf.mxu0
    %v1986 = vadd.f32 %v1812, %v1985
    %v1987 = vpop.f32.mrf.mxu0
    %v1988 = vadd.f32 %v1812, %v1987
    %1989 = vmatprep.mubr.f32.mxu0 0.0
    %1990 = vmatmul.mubr.f32.gmra.mxu0 %v1802
    %v1991 = vpop.f32.mrf.mxu0
    %v1992 = vadd.f32 %v1817, %v1991
    %v1993 = vpop.f32.mrf.mxu0
    %v1994 = vadd.f32 %v1817, %v1993
    %1995 = vmatprep.mubr.f32.mxu0 0.0
    %1996 = vmatmul.mubr.f32.gmra.mxu0 %v1803
    %v1997 = vpop.f32.mrf.mxu0
    %v1998 = vadd.f32 %v1822, %v1997
    %v1999 = vpop.f32.mrf.mxu0
    %v2000 = vadd.f32 %v1822, %v1999
    %2001 = vdwg.mxu0
    %v2002 = vxor.u32 %v1903, 2147483648
    %v2003 = vxor.u32 %v1905, 2147483648
    %v2004 = vxor.u32 %v1992, 2147483648
    %v2005 = vxor.u32 %v1994, 2147483648
    %v2006 = vxor.u32 %v1909, 2147483648
    %v2007 = vxor.u32 %v1911, 2147483648
    %v2008 = vxor.u32 %v1998, 2147483648
    %v2009 = vxor.u32 %v2000, 2147483648
    %v2010 = vmul.f32 %v2002, 1.442695
    %v2011 = vpow.pop %v2010
    %v2012 = vmul.f32 %v2003, 1.442695
    %v2013 = vpow.pop %v2012
    %v2014 = vmul.f32 %v2004, 1.442695
    %v2015 = vpow.pop %v2014
    %v2016 = vmul.f32 %v2005, 1.442695
    %v2017 = vpow.pop %v2016
    %v2018 = vmul.f32 %v2006, 1.442695
    %v2019 = vpow.pop %v2018
    %v2020 = vmul.f32 %v2007, 1.442695
    %v2021 = vpow.pop %v2020
    %v2022 = vmul.f32 %v2008, 1.442695
    %v2023 = vpow.pop %v2022
    %v2024 = vmul.f32 %v2009, 1.442695
    %v2025 = vpow.pop %v2024
    %v2026 = vadd.f32 %v2011, 1.0
    %v2027 = vadd.f32 %v2013, 1.0
    %v2028 = vadd.f32 %v2015, 1.0
    %v2029 = vadd.f32 %v2017, 1.0
    %v2030 = vadd.f32 %v2019, 1.0
    %v2031 = vadd.f32 %v2021, 1.0
    %v2032 = vadd.f32 %v2023, 1.0
    %v2033 = vadd.f32 %v2025, 1.0
    %v2034 = vrcp.pop %v2026
    %v2035 = vmul.f32 1.0, %v2034
    %v2036 = vrcp.pop %v2027
    %v2037 = vmul.f32 1.0, %v2036
    %v2038 = vrcp.pop %v2028
    %v2039 = vmul.f32 1.0, %v2038
    %v2040 = vrcp.pop %v2029
    %v2041 = vmul.f32 1.0, %v2040
    %v2042 = vrcp.pop %v2030
    %v2043 = vmul.f32 1.0, %v2042
    %v2044 = vrcp.pop %v2031
    %v2045 = vmul.f32 1.0, %v2044
    %v2046 = vrcp.pop %v2032
    %v2047 = vmul.f32 1.0, %v2046
    %v2048 = vrcp.pop %v2033
    %v2049 = vmul.f32 1.0, %v2048
    %v2050 = vsub.f32 %v52, %v1891
    %v2051 = vsub.f32 %v53, %v1893
    %v2052 = vsub.f32 %v54, %v1980
    %v2053 = vsub.f32 %v55, %v1982
    %v2054 = vsub.f32 %v56, %v1897
    %v2055 = vsub.f32 %v57, %v1899
    %v2056 = vsub.f32 %v58, %v1986
    %v2057 = vsub.f32 %v59, %v1988
    %v2058 = vmul.f32 %v2035, %v2050
    %v2059 = vmul.f32 %v2037, %v2051
    %v2060 = vmul.f32 %v2039, %v2052
    %v2061 = vmul.f32 %v2041, %v2053
    %v2062 = vmul.f32 %v2043, %v2054
    %v2063 = vmul.f32 %v2045, %v2055
    %v2064 = vmul.f32 %v2047, %v2056
    %v2065 = vmul.f32 %v2049, %v2057
    %v2066 = vadd.f32 %v2058, %v1891
    %v2067 = vadd.f32 %v2059, %v1893
    %v2068 = vadd.f32 %v2060, %v1980
    %v2069 = vadd.f32 %v2061, %v1982
    %v2070 = vadd.f32 %v2062, %v1897
    %v2071 = vadd.f32 %v2063, %v1899
    %v2072 = vadd.f32 %v2064, %v1986
    %v2073 = vadd.f32 %v2065, %v1988
    %v2074 = vadd.f32 %v2066, %v44
    %v2075 = vadd.f32 %v2067, %v45
    %v2076 = vadd.f32 %v2068, %v46
    %v2077 = vadd.f32 %v2069, %v47
    %v2078 = vadd.f32 %v2070, %v48
    %v2079 = vadd.f32 %v2071, %v49
    %v2080 = vadd.f32 %v2072, %v50
    %v2081 = vadd.f32 %v2073, %v51
    %2082 = vst [vmem:[#allocation2] sm:$0xff] %v2074
    %2083 = vst [vmem:[#allocation2 + $0x8] sm:$0xff] %v2075
    %2084 = vst [vmem:[#allocation2 + $0x10] sm:$0xff] %v2076
    %2085 = vst [vmem:[#allocation2 + $0x18] sm:$0xff] %v2077
    %2086 = vst [vmem:[#allocation2 + $0x20] sm:$0xff] %v2078
    %2087 = vst [vmem:[#allocation2 + $0x28] sm:$0xff] %v2079
    %2088 = vst [vmem:[#allocation2 + $0x30] sm:$0xff] %v2080
    %2089 = vst [vmem:[#allocation2 + $0x38] sm:$0xff] %v2081
    // Predicated region
    $region26: #{tpu_custom_call.1} parent=1 // pred_check
      _
    $region27: #{tpu_custom_call.1} parent=1 // pred_check_branch
      %2091 = sbr.rel (0) target = $region29
    $region28: #{tpu_custom_call.1} parent=1 // pred_region
      %s2093 = ssub.s32 1024, 1024
      %2094 = vsyncadd [#allocation3], %s2093
      %s2095 = sshll.u32 [#allocation2], 4
      %s2096 = int_to_ptr.vmem [resolvable:$true] %s2095
      %2101 = dma.vmem_to_hbm [thread:$0]  %s2096, 1024, %s6, [#allocation3], 512, 512, 32
    $region29: #{tpu_custom_call.1} parent=1 // pred_fallthru
      _
    // Predicated region
    $region30: #{tpu_custom_call.1} parent=1 // pred_check
      _
    $region31: #{tpu_custom_call.1} parent=1 // pred_check_branch
      %2103 = sbr.rel (0) target = $region33
    $region32: #{tpu_custom_call.1} parent=1 // pred_region
      %2104 = dma.done [#allocation3], 1024
    $region33: #{tpu_custom_call.1} parent=1 // pred_fallthru
      _
    %2105 = vsyncpa [#allocation3], 1

</llo_original>
